<compile_context>
chip_gen: v7x
topology: tpu7x:2x2x1
jax: 0.10.0
libtpu: 0.0.40
codegen_flags: <defaults>
</compile_context>

<pallas_src>
import functools

import jax
import jax.numpy as jnp
from jax.experimental import pallas as pl
from jax.experimental.pallas import tpu as pltpu

EPS = 1e-5
LANES = 128
SUBLANES = 8
TILE_Q = 16          # row-tile quantum (bf16 sublane packing = 16 rows/vreg)


def _round_up(x, m):
    return (x + m - 1) // m * m


def _vmem_limit_bytes():
    """~75% of physical VMEM (=> ~96 MiB v5e/v6e, ~48 MiB v7x); 32 MiB fallback."""
    try:
        cap = int(pltpu.get_tpu_info().vmem_capacity_bytes)
        return min(cap * 3 // 4, 100 * 1024 * 1024)
    except Exception:
        return 32 * 1024 * 1024


# ---------------------------------------------------------------------------
# Pass A kernel: conv (single folded matmul per row tile) + per-channel stats.
# Grid = (core_split, row_tiles_per_slot); axis 0 "parallel" (per-slot partial
# stats, safe on v7x 2-TC), axis 1 "arbitrary" (resident accumulators).
# ---------------------------------------------------------------------------
def _conv_stats_kernel(x_ref, w_ref, y_ref, sum_ref, sq_ref):
    @pl.when(pl.program_id(1) == 0)
    def _():
        sum_ref[...] = jnp.zeros_like(sum_ref)
        sq_ref[...] = jnp.zeros_like(sq_ref)

    # One MXU push: (TR, Kcp) x (Kcp, cop), bf16 operands, f32 accumulation.
    acc = jnp.dot(x_ref[...], w_ref[...], preferred_element_type=jnp.float32)
    y_ref[...] = acc.astype(y_ref.dtype)          # bf16 store (halves HBM traffic)

    # Partial per-channel sums reduced to (8, cop): pure VPU adds across vregs
    # (sublane grouping is layout-preserving); final 8-row fold happens in glue.
    tr, cop = acc.shape
    a3 = acc.reshape(tr // SUBLANES, SUBLANES, cop)
    sum_ref[...] += jnp.sum(a3, axis=0)
    sq_ref[...] += jnp.sum(a3 * a3, axis=0)


# ---------------------------------------------------------------------------
# Pass B kernel: y*scale + shift -> ReLU (+ residual).  Row-"parallel".
# ---------------------------------------------------------------------------
def _bn_relu_kernel(add_residual, y_ref, scale_ref, shift_ref, *rest):
    if add_residual:
        res_ref, out_ref = rest
    else:
        (out_ref,) = rest

    y = y_ref[...].astype(jnp.float32) * scale_ref[...] + shift_ref[...]
    y = jnp.maximum(y, 0.0)                       # BN + ReLU
    if add_residual:
        y = y + res_ref[...].astype(jnp.float32)  # residual added AFTER ReLU
    out_ref[...] = y.astype(out_ref.dtype)


# ---------------------------------------------------------------------------
# JAX glue: folded im2col (taps concatenated along the channel axis).
# ---------------------------------------------------------------------------
def _im2col_folded(x_ndhwc, kshape):
    N, D, H, W, Ci = x_ndhwc.shape
    kd, kh, kw = kshape
    pad = ((0, 0), (kd // 2, kd // 2), (kh // 2, kh // 2),
           (kw // 2, kw // 2), (0, 0))
    xp = jnp.pad(x_ndhwc, pad)
    cols = []
    for a in range(kd):
        for b in range(kh):
            for c in range(kw):
                cols.append(xp[:, a:a + D, b:b + H, c:c + W, :])
    xcol = jnp.concatenate(cols, axis=-1)          # (N, D, H, W, K*Ci)
    return xcol.reshape(N * D * H * W, kd * kh * kw * Ci)


def _fold_weight(weight_pt, ci_eff, kcp, cop):
    # PyTorch (Co, Ci, kd, kh, kw) -> (kd, kh, kw, ci_eff, Co) -> (kcp, cop)
    co, ci, kd, kh, kw = weight_pt.shape
    w = jnp.transpose(weight_pt, (2, 3, 4, 1, 0))
    w = jnp.pad(w, ((0, 0), (0, 0), (0, 0), (0, ci_eff - ci), (0, 0)))
    w = w.reshape(kd * kh * kw * ci_eff, co)
    w = jnp.pad(w, ((0, kcp - w.shape[0]), (0, cop - co)))
    return w.astype(jnp.bfloat16)


def conv_bn_relu_stage(x_ndhwc, weight_pt, gamma, beta, kshape, *, cop, rows,
                       rows_p, tile_a, tile_b, nsplit, vmem_limit, out_dtype,
                       residual_padded=None):
    """One Conv3d + BN3d(train) + ReLU (+ residual) stage.

    Returns the padded (rows_p, cop) activation in `out_dtype`.
    """
    N, D, H, W, ci_eff = x_ndhwc.shape
    kd, kh, kw = kshape
    Co = weight_pt.shape[0]
    Kc = kd * kh * kw * ci_eff

    # Lane-dense contraction dim when the padding overhead is small (<= 1/8).
    Kcp = _round_up(Kc, LANES)
    if Kcp > Kc + Kc // 8:
        Kcp = Kc

    ntiles_a = rows_p // tile_a
    ntiles_per = ntiles_a // nsplit
    ntiles_b = rows_p // tile_b

    # ---- glue: folded im2col (bf16), row/contraction padding ----------------
    xcol = _im2col_folded(x_ndhwc.astype(jnp.bfloat16), kshape)
    xcol = jnp.pad(xcol, ((0, rows_p - rows), (0, Kcp - Kc)))
    w = _fold_weight(weight_pt, ci_eff, Kcp, cop)

    # ---- Pass A: conv + per-channel partial sum / sum-of-squares ------------
    flops_a = 2 * rows_p * Kcp * cop
    bytes_a = (rows_p * Kcp * 2 + Kcp * cop * 2 + rows_p * cop * 2
               + 4 * nsplit * SUBLANES * cop * 4)
    y, psum, psq = pl.pallas_call(
        _conv_stats_kernel,
        grid=(nsplit, ntiles_per),
        in_specs=[
            pl.BlockSpec((tile_a, Kcp), lambda c, i: (c * ntiles_per + i, 0)),
            # weight: small, constant index_map -> stays resident across steps
            pl.BlockSpec((Kcp, cop), lambda c, i: (0, 0)),
        ],
        out_specs=(
            pl.BlockSpec((tile_a, cop), lambda c, i: (c * ntiles_per + i, 0)),
            pl.BlockSpec((SUBLANES, cop), lambda c, i: (c, 0)),   # per-slot stats
            pl.BlockSpec((SUBLANES, cop), lambda c, i: (c, 0)),
        ),
        out_shape=(
            jax.ShapeDtypeStruct((rows_p, cop), jnp.bfloat16),
            jax.ShapeDtypeStruct((nsplit * SUBLANES, cop), jnp.float32),
            jax.ShapeDtypeStruct((nsplit * SUBLANES, cop), jnp.float32),
        ),
        compiler_params=pltpu.CompilerParams(
            dimension_semantics=("parallel", "arbitrary"),
            vmem_limit_bytes=vmem_limit),
        cost_estimate=pl.CostEstimate(flops=flops_a, transcendentals=0,
                                      bytes_accessed=bytes_a),
    )(xcol, w)

    # ---- tiny glue: combine partial stats -> (scale, shift) -----------------
    inv_n = 1.0 / float(rows)          # stats over the true N*D*H*W rows only
    ssum = jnp.sum(psum, axis=0)
    ssq = jnp.sum(psq, axis=0)
    mean = ssum * inv_n
    var = jnp.maximum(ssq * inv_n - mean * mean, 0.0)       # biased (train-mode)
    g = jnp.pad(gamma.astype(jnp.float32), ((0, cop - Co),))
    b = jnp.pad(beta.astype(jnp.float32), ((0, cop - Co),))
    scale_v = g * jax.lax.rsqrt(var + EPS)
    shift_v = b - mean * scale_v
    scale = scale_v.reshape(1, cop)
    shift = shift_v.reshape(1, cop)

    # ---- Pass B: normalize + ReLU (+ residual), row-parallel ----------------
    add_res = residual_padded is not None
    in_specs = [
        pl.BlockSpec((tile_b, cop), lambda i: (i, 0)),
        pl.BlockSpec((1, cop), lambda i: (0, 0)),
        pl.BlockSpec((1, cop), lambda i: (0, 0)),
    ]
    args = [y, scale, shift]
    if add_res:
        in_specs.append(pl.BlockSpec((tile_b, cop), lambda i: (i, 0)))
        args.append(residual_padded)

    elem = jnp.dtype(out_dtype).itemsize
    bytes_b = rows_p * cop * (2 + elem) + (rows_p * cop * 2 if add_res else 0)
    out = pl.pallas_call(
        functools.partial(_bn_relu_kernel, add_res),
        grid=(ntiles_b,),
        in_specs=in_specs,
        out_specs=pl.BlockSpec((tile_b, cop), lambda i: (i, 0)),
        out_shape=jax.ShapeDtypeStruct((rows_p, cop), out_dtype),
        compiler_params=pltpu.CompilerParams(
            dimension_semantics=("parallel",),
            vmem_limit_bytes=vmem_limit),
        cost_estimate=pl.CostEstimate(
            flops=rows_p * cop * (4 if add_res else 3),
            transcendentals=0, bytes_accessed=bytes_b),
    )(*args)
    return out


def res_block_forward(x_ncdhw, params, row_tile_a=512, row_tile_b=2048):
    """Equivalent of Res_block.forward, input/output in PyTorch NCDHW layout.

    BatchNorm uses training-mode batch statistics (fresh nn.Module forward);
    conv biases are unused because batch-stat BN cancels them exactly.
    """
    x = jnp.transpose(x_ncdhw, (0, 2, 3, 4, 1)).astype(jnp.float32)  # NDHWC
    N, D, H, W, Ci = x.shape
    Co = params["w1"].shape[0]
    cop = _round_up(max(Co, LANES), LANES)   # lane-dense channel width
    flow_padded = (Co == cop)                # real UNet: keep padded buf flowing

    rows = N * D * H * W
    vmem_limit = _vmem_limit_bytes()

    # Worst-case contraction width across the three stages (for VMEM sizing).
    ci23 = cop if flow_padded else Co
    kcp_max = _round_up(max(9 * Ci, 27 * ci23), LANES)

    # Pass A row tile: start large, shrink until double-buffered blocks fit
    # the generation's VMEM budget (matters on v7x's 64 MiB).
    tile_a = _round_up(min(row_tile_a, _round_up(rows, TILE_Q)), TILE_Q)

    def _vmem_need(t):
        return (2 * t * kcp_max * 2          # xcol block (bf16, x2 buffers)
                + 2 * kcp_max * cop * 2      # weight block (bf16, x2 buffers)
                + 2 * t * cop * 2            # y output block (bf16, x2 buffers)
                + 4 * SUBLANES * cop * 4)    # stats accumulators

    while tile_a > TILE_Q and _vmem_need(tile_a) > vmem_limit * 3 // 5:
        tile_a = max(TILE_Q, _round_up(tile_a // 2, TILE_Q))

    rows_p = _round_up(rows, tile_a)
    ntiles_a = rows_p // tile_a
    # Split Pass A into 2 "parallel" slots (v7x 2 TensorCores) with per-slot
    # partial stats; harmless (sequential) on single-TC chips.
    nsplit = 2 if (ntiles_a >= 2 and ntiles_a % 2 == 0) else 1

    # Pass B tile: its per-row VMEM cost is tiny, so use a larger multiple of
    # tile_a (bounded by row_tile_b) that still divides rows_p.
    tile_b = tile_a
    for f in (8, 4, 2, 1):
        if ntiles_a % f == 0 and tile_a * f <= max(row_tile_b, tile_a):
            tile_b = tile_a * f
            break

    stage = functools.partial(
        conv_bn_relu_stage, cop=cop, rows=rows, rows_p=rows_p,
        tile_a=tile_a, tile_b=tile_b, nsplit=nsplit, vmem_limit=vmem_limit)

    # Stage 1: conv_3x3x1 -> bn1 -> relu   (this is the residual, kept bf16).
    y1p = stage(x, params["w1"], params["g1"], params["beta1"], (3, 3, 1),
                out_dtype=jnp.bfloat16)
    if flow_padded:
        x2 = y1p[:rows].reshape(N, D, H, W, cop)      # padded channels are 0 -> exact
    else:
        x2 = y1p[:rows, :Co].reshape(N, D, H, W, Co)

    # Stage 2: conv_3x3x3_1 -> bn2 -> relu
    y2p = stage(x2, params["w2"], params["g2"], params["beta2"], (3, 3, 3),
                out_dtype=jnp.bfloat16)
    if flow_padded:
        x3 = y2p[:rows].reshape(N, D, H, W, cop)
    else:
        x3 = y2p[:rows, :Co].reshape(N, D, H, W, Co)

    # Stage 3: conv_3x3x3_2 -> bn3 -> relu -> += residual (fused in Pass B)
    y3p = stage(x3, params["w3"], params["g3"], params["beta3"], (3, 3, 3),
                out_dtype=jnp.float32, residual_padded=y1p)

    out = y3p[:rows, :Co].reshape(N, D, H, W, Co)
    return jnp.transpose(out, (0, 4, 1, 2, 3))        # -> NCDHW


def make_params(key, chan_in, chan_out):
    ks = jax.random.split(key, 12)
    f32 = jnp.float32

    def conv_w(k, co, ci, kd, kh, kw):
        return 0.1 * jax.random.normal(k, (co, ci, kd, kh, kw), f32)

    return {
        # conv_3x3x1 + bn1
        "w1": conv_w(ks[0], chan_out, chan_in, 3, 3, 1),
        "b1": 0.1 * jax.random.normal(ks[1], (chan_out,), f32),  # cancelled by BN
        "g1": 1.0 + 0.1 * jax.random.normal(ks[2], (chan_out,), f32),
        "beta1": 0.1 * jax.random.normal(ks[3], (chan_out,), f32),
        # conv_3x3x3_1 + bn2
        "w2": conv_w(ks[4], chan_out, chan_out, 3, 3, 3),
        "b2": 0.1 * jax.random.normal(ks[5], (chan_out,), f32),  # cancelled by BN
        "g2": 1.0 + 0.1 * jax.random.normal(ks[6], (chan_out,), f32),
        "beta2": 0.1 * jax.random.normal(ks[7], (chan_out,), f32),
        # conv_3x3x3_2 + bn3
        "w3": conv_w(ks[8], chan_out, chan_out, 3, 3, 3),
        "b3": 0.1 * jax.random.normal(ks[9], (chan_out,), f32),  # cancelled by BN
        "g3": 1.0 + 0.1 * jax.random.normal(ks[10], (chan_out,), f32),
        "beta3": 0.1 * jax.random.normal(ks[11], (chan_out,), f32),
    }


if __name__ == "__main__":
    key = jax.random.PRNGKey(0)
    k_x, k_p = jax.random.split(key)

    # Small NCDHW input: (N, Cin, D, H, W); rows = 2*8*8*16 = 2048 so the
    # accumulator (multi-step) and 2-slot split paths are both exercised.
    N, CHAN_IN, CHAN_OUT = 2, 4, 8
    D, H, W = 8, 8, 16
    x = jax.random.normal(k_x, (N, CHAN_IN, D, H, W), jnp.float32)

    params = make_params(k_p, CHAN_IN, CHAN_OUT)

    out = res_block_forward(x, params)
    out = jax.block_until_ready(out)
    assert out.shape == (N, CHAN_OUT, D, H, W), out.shape
    assert bool(jnp.all(jnp.isfinite(out)))
    print("KERNEL_OK")
</pallas_src>

<mosaic_0001>
module attributes {stable_mosaic.version = 11 : i64} {
  func.func @_conv_stats_kernel(%arg0: i32, %arg1: i32, %arg2: memref<512x36xbf16, #tpu.memory_space<vmem>>, %arg3: memref<36x128xbf16, #tpu.memory_space<vmem>>, %arg4: memref<512x128xbf16, #tpu.memory_space<vmem>>, %arg5: memref<8x128xf32, #tpu.memory_space<vmem>>, %arg6: memref<8x128xf32, #tpu.memory_space<vmem>>) attributes {dimension_semantics = [#tpu.dimension_semantics<parallel>, #tpu.dimension_semantics<arbitrary>], iteration_bounds = array<i64: 2, 2>, scalar_prefetch = 0 : i64, scratch_operands = 0 : i64, tpu.core_type = #tpu.core_type<tc>, window_params = [{transform_indices = @transform_0, window_bounds = array<i64: 512, 36>}, {pipeline_mode = #tpu.pipeline_mode<synchronous>, transform_indices = @transform_1, window_bounds = array<i64: 36, 128>}, {transform_indices = @transform_2, window_bounds = array<i64: 512, 128>}, {transform_indices = @transform_3, window_bounds = array<i64: 8, 128>}, {transform_indices = @transform_4, window_bounds = array<i64: 8, 128>}]} {
    %c0_i32 = arith.constant 0 : i32
    %0 = arith.cmpi eq, %arg1, %c0_i32 : i32
    %1 = arith.extui %0 : i1 to i32
    %c0_i32_0 = arith.constant 0 : i32
    %2 = arith.cmpi ne, %1, %c0_i32_0 : i32
    scf.if %2 {
      %cst_16 = arith.constant 0.000000e+00 : f32
      %18 = vector.broadcast %cst_16 : f32 to vector<8x128xf32>
      %c0_17 = arith.constant 0 : index
      %c0_18 = arith.constant 0 : index
      %19 = vector.load %arg5[%c0_17, %c0_18] : memref<8x128xf32, #tpu.memory_space<vmem>>, vector<8x128xf32>
      tpu.vector_store %arg5[%c0_17, %c0_18], %18 {strides = array<i32>} : memref<8x128xf32, #tpu.memory_space<vmem>>, vector<8x128xf32>,
      %cst_19 = arith.constant 0.000000e+00 : f32
      %20 = vector.broadcast %cst_19 : f32 to vector<8x128xf32>
      %c0_20 = arith.constant 0 : index
      %c0_21 = arith.constant 0 : index
      %21 = vector.load %arg6[%c0_20, %c0_21] : memref<8x128xf32, #tpu.memory_space<vmem>>, vector<8x128xf32>
      tpu.vector_store %arg6[%c0_20, %c0_21], %20 {strides = array<i32>} : memref<8x128xf32, #tpu.memory_space<vmem>>, vector<8x128xf32>,
    } else {
    }
    %c0 = arith.constant 0 : index
    %c0_1 = arith.constant 0 : index
    %3 = vector.load %arg2[%c0, %c0_1] : memref<512x36xbf16, #tpu.memory_space<vmem>>, vector<512x36xbf16>
    %c0_2 = arith.constant 0 : index
    %c0_3 = arith.constant 0 : index
    %4 = vector.load %arg3[%c0_2, %c0_3] : memref<36x128xbf16, #tpu.memory_space<vmem>>, vector<36x128xbf16>
    %cst = arith.constant dense<0.000000e+00> : vector<512x128xf32>
    %5 = tpu.matmul %3, %4, %cst {dimension_numbers = #tpu.dot_dimension_numbers<[1], [0], [0], [1], [0, 0, 1, 1], [], []>} : vector<512x36xbf16>, vector<36x128xbf16>, vector<512x128xf32> -> vector<512x128xf32>
    %6 = arith.truncf %5 : vector<512x128xf32> to vector<512x128xbf16>
    %c0_4 = arith.constant 0 : index
    %c0_5 = arith.constant 0 : index
    %7 = vector.load %arg4[%c0_4, %c0_5] : memref<512x128xbf16, #tpu.memory_space<vmem>>, vector<512x128xbf16>
    tpu.vector_store %arg4[%c0_4, %c0_5], %6 {strides = array<i32>} : memref<512x128xbf16, #tpu.memory_space<vmem>>, vector<512x128xbf16>,
    %8 = vector.shape_cast %5 : vector<512x128xf32> to vector<64x8x128xf32>
    %c0_6 = arith.constant 0 : index
    %c0_7 = arith.constant 0 : index
    %9 = vector.load %arg5[%c0_6, %c0_7] : memref<8x128xf32, #tpu.memory_space<vmem>>, vector<8x128xf32>
    %cst_8 = arith.constant dense<0.000000e+00> : vector<8x128xf32>
    %10 = vector.multi_reduction <add>, %8, %cst_8 [0] : vector<64x8x128xf32> to vector<8x128xf32>
    %11 = arith.addf %9, %10 : vector<8x128xf32>
    %c0_9 = arith.constant 0 : index
    %c0_10 = arith.constant 0 : index
    %12 = vector.load %arg5[%c0_9, %c0_10] : memref<8x128xf32, #tpu.memory_space<vmem>>, vector<8x128xf32>
    tpu.vector_store %arg5[%c0_9, %c0_10], %11 {strides = array<i32>} : memref<8x128xf32, #tpu.memory_space<vmem>>, vector<8x128xf32>,
    %c0_11 = arith.constant 0 : index
    %c0_12 = arith.constant 0 : index
    %13 = vector.load %arg6[%c0_11, %c0_12] : memref<8x128xf32, #tpu.memory_space<vmem>>, vector<8x128xf32>
    %14 = arith.mulf %8, %8 : vector<64x8x128xf32>
    %cst_13 = arith.constant dense<0.000000e+00> : vector<8x128xf32>
    %15 = vector.multi_reduction <add>, %14, %cst_13 [0] : vector<64x8x128xf32> to vector<8x128xf32>
    %16 = arith.addf %13, %15 : vector<8x128xf32>
    %c0_14 = arith.constant 0 : index
    %c0_15 = arith.constant 0 : index
    %17 = vector.load %arg6[%c0_14, %c0_15] : memref<8x128xf32, #tpu.memory_space<vmem>>, vector<8x128xf32>
    tpu.vector_store %arg6[%c0_14, %c0_15], %16 {strides = array<i32>} : memref<8x128xf32, #tpu.memory_space<vmem>>, vector<8x128xf32>,
    return
  }
  func.func @transform_0(%arg0: i32, %arg1: i32) -> (i32, i32) {
    %c2_i32 = arith.constant 2 : i32
    %0 = arith.muli %arg0, %c2_i32 : i32
    %1 = arith.addi %0, %arg1 : i32
    %c0_i32 = arith.constant 0 : i32
    %c0_i32_0 = arith.constant 0 : i32
    return %1, %c0_i32 : i32, i32
  }
  func.func @transform_1(%arg0: i32, %arg1: i32) -> (i32, i32) {
    %c0_i32 = arith.constant 0 : i32
    %c0_i32_0 = arith.constant 0 : i32
    %c0_i32_1 = arith.constant 0 : i32
    return %c0_i32, %c0_i32_0 : i32, i32
  }
  func.func @transform_2(%arg0: i32, %arg1: i32) -> (i32, i32) {
    %c2_i32 = arith.constant 2 : i32
    %0 = arith.muli %arg0, %c2_i32 : i32
    %1 = arith.addi %0, %arg1 : i32
    %c0_i32 = arith.constant 0 : i32
    %c0_i32_0 = arith.constant 0 : i32
    return %1, %c0_i32 : i32, i32
  }
  func.func @transform_3(%arg0: i32, %arg1: i32) -> (i32, i32) {
    %c0_i32 = arith.constant 0 : i32
    %c0_i32_0 = arith.constant 0 : i32
    return %arg0, %c0_i32 : i32, i32
  }
  func.func @transform_4(%arg0: i32, %arg1: i32) -> (i32, i32) {
    %c0_i32 = arith.constant 0 : i32
    %c0_i32_0 = arith.constant 0 : i32
    return %arg0, %c0_i32 : i32, i32
  }
}

</mosaic_0001>

<llo_original>
// kernel: tpu_custom_call.1
$region0: #{tpu_custom_call.1}
  #allocation0 [shape = 'u32[]', space=smem, size = 0x4, offset = 0x4, fixed_abs, tag = 'smem constant byte address 0x4 - core index']
  #allocation1 [shape = 'u32[144,128]{1,0:T(1,128)}', space=vmem, size = 0x12000, scoped, tag = 'internal scratch']
  %s0 = inlined_call_operand.vmem [shape: bf16[2048,36], index: 0, kind: input, shape index: {}]
  %s1 = inlined_call_operand.vmem [shape: bf16[36,128], index: 1, kind: input, shape index: {}]
  %s2 = inlined_call_operand.hbm [shape: bf16[2048,128], index: 2, kind: output, shape index: {0}]
  %s3 = inlined_call_operand.hbm [shape: f32[16,128], index: 3, kind: output, shape index: {1}]
  %s4 = inlined_call_operand.hbm [shape: f32[16,128], index: 4, kind: output, shape index: {2}]
  %5 = xla_tuple %s2, %s3, %s4
  %s6 = sld [smem:[#allocation0]]
  $region61: #{tpu_custom_call.1} parent=0
    _
  %s8 = ssub.s32 1, %s6
  %s9 = scalar_select 0, %s8, %s6
  $region1: #{tpu_custom_call.1} parent=0
    #allocation2 [shape = 'u8[262144]{0}', space=vmem, size = 0x40000, scoped, tag = 'output window, operand 0']
    #allocation3 [shape = 's32[2]{0}', space=sflag, size = 0x8, scoped, tag = 'scoped memory for tpu_custom_call.1']
    #allocation4 [shape = 'u8[8192]{0}', space=vmem, size = 0x2000, scoped, tag = 'output window, operand 1']
    #allocation5 [shape = 's32[2]{0}', space=sflag, size = 0x8, scoped, tag = 'scoped memory for tpu_custom_call.1']
    #allocation6 [shape = 'u8[8192]{0}', space=vmem, size = 0x2000, scoped, tag = 'output window, operand 2']
    %10 = vsyncpa [#allocation3], 0
    %s11 = scalar_lea.sflag [#allocation3], 1
    %12 = vsyncpa %s11, 0
    %13 = vsyncpa [#allocation5], 0
    %s14 = scalar_lea.sflag [#allocation5], 1
    %15 = vsyncpa %s14, 0
    loop: start=0, step=1, limit=6
    $region2: #{tpu_custom_call.1} parent=1 // loop_pre_header
      _
    $region3: #{tpu_custom_call.1} parent=1 // loop_header
      %s17 = sphi 0, %s21
      %p18 = scmp.ge.s32.totalorder %s17, 6
      %s24 = sphi 0, %s36
      %s25 = sphi 0, %s32
      %s26 = sphi 0, %s24
      %s27 = sphi 0, %s25
      %s28 = sphi 0, %s26
      %s29 = sphi 0, %s27
      %s43 = sphi 0, %s45
      %s46 = sphi 0, %s43
      %s47 = sphi 0, %s46
      %s63 = sphi 0, %s47
      %s67 = sphi 0, %s67
      %s69 = sphi 0, %s67
      %s70 = sphi 0, %s69
      %s84 = sphi 0, %s70
      %s94 = sphi 0, %s96
      %s97 = sphi 0, %s94
      %s98 = sphi 0, %s97
      %s114 = sphi 0, %s98
      %s120 = sphi 0, %s122
      %s123 = sphi 0, %s120
      %s124 = sphi 0, %s123
      %s140 = sphi 0, %s124
      %s146 = sphi 0, %s148
      %s149 = sphi 0, %s146
      %s150 = sphi 0, %s149
      %s166 = sphi 0, %s150
    $region4: #{tpu_custom_call.1} parent=1 // loop_header_branch
      %20 = sbr.rel (%p18) target = $region8
    $region5: #{tpu_custom_call.1} parent=1 // loop_body
      %s22 = ssub.s32 %s17, 1
      %s23 = ssub.s32 %s17, 2
      %s30 = sadd.s32 1, %s25
      %p31 = scmp.ge.s32.totalorder %s30, 2
      %s32 = scalar_select %p31, 0, %s30
      %s33 = sadd.s32 1, %s24
      %s34 = scalar_select %p31, %s33, %s24
      %p35 = scmp.ge.s32.totalorder %s34, 2
      %s36 = scalar_select %p35, 0, %s34
      %s37 = smul.u32 %s24, 2
      %s38 = sadd.s32 %s37, %s25
      %s39 = smul.u32 %s36, 2
      %s40 = sadd.s32 %s39, %s32
      %s41 = ssub.s32 %s38, %s40
      %p42 = scmp.eq.s32.totalorder %s41, 0
      %s44 = sadd.s32 %s43, 1
      %s45 = scalar_select %p42, %s43, %s44
      %p48 = pneg %p42
      %p49 = scmp.eq.s32.totalorder %s17, 3
      %p50 = por %p48, %p49
      %p51 = scmp.ne.s32.totalorder %s43, %s46
      %p52 = scmp.eq.s32.totalorder %s17, 0
      %p53 = por %p51, %p52
      %p54 = scmp.ne.s32.totalorder %s43, %s46
      %p55 = scmp.eq.s32.totalorder %s22, 3
      %p56 = por %p54, %p55
      %p57 = scmp.ne.s32.totalorder %s46, %s47
      %p58 = scmp.eq.s32.totalorder %s22, 0
      %p59 = por %p57, %p58
      %p60 = scmp.ne.s32.totalorder %s46, %s47
      %p61 = scmp.eq.s32.totalorder %s23, 3
      %p62 = por %p60, %p61
      %p64 = scmp.ne.s32.totalorder %s47, %s63
      %p65 = scmp.eq.s32.totalorder %s23, 0
      %p66 = por %p64, %p65
      %s68 = sadd.s32 %s67, 1
      %p71 = scmp.eq.s32.totalorder %s17, 3
      %p72 = scmp.ne.s32.totalorder %s67, %s69
      %p73 = scmp.eq.s32.totalorder %s17, 0
      %p74 = por %p72, %p73
      %p75 = scmp.ne.s32.totalorder %s67, %s69
      %p76 = scmp.eq.s32.totalorder %s22, 3
      %p77 = por %p75, %p76
      %p78 = scmp.ne.s32.totalorder %s69, %s70
      %p79 = scmp.eq.s32.totalorder %s22, 0
      %p80 = por %p78, %p79
      %p81 = scmp.ne.s32.totalorder %s69, %s70
      %p82 = scmp.eq.s32.totalorder %s23, 3
      %p83 = por %p81, %p82
      %p85 = scmp.ne.s32.totalorder %s70, %s84
      %p86 = scmp.eq.s32.totalorder %s23, 0
      %p87 = por %p85, %p86
      %s88 = smul.u32 %s24, 2
      %s89 = sadd.s32 %s88, %s25
      %s90 = smul.u32 %s36, 2
      %s91 = sadd.s32 %s90, %s32
      %s92 = ssub.s32 %s89, %s91
      %p93 = scmp.eq.s32.totalorder %s92, 0
      %s95 = sadd.s32 %s94, 1
      %s96 = scalar_select %p93, %s94, %s95
      %p99 = pneg %p93
      %p100 = scmp.eq.s32.totalorder %s17, 3
      %p101 = por %p99, %p100
      %p102 = scmp.ne.s32.totalorder %s94, %s97
      %p103 = scmp.eq.s32.totalorder %s17, 0
      %p104 = por %p102, %p103
      %p105 = scmp.ne.s32.totalorder %s94, %s97
      %p106 = scmp.eq.s32.totalorder %s22, 3
      %p107 = por %p105, %p106
      %p108 = scmp.ne.s32.totalorder %s97, %s98
      %p109 = scmp.eq.s32.totalorder %s22, 0
      %p110 = por %p108, %p109
      %p111 = scmp.ne.s32.totalorder %s97, %s98
      %p112 = scmp.eq.s32.totalorder %s23, 3
      %p113 = por %p111, %p112
      %p115 = scmp.ne.s32.totalorder %s98, %s114
      %p116 = scmp.eq.s32.totalorder %s23, 0
      %p117 = por %p115, %p116
      %s118 = ssub.s32 %s24, %s36
      %p119 = scmp.eq.s32.totalorder %s118, 0
      %s121 = sadd.s32 %s120, 1
      %s122 = scalar_select %p119, %s120, %s121
      %p125 = pneg %p119
      %p126 = scmp.eq.s32.totalorder %s17, 3
      %p127 = por %p125, %p126
      %p128 = scmp.ne.s32.totalorder %s120, %s123
      %p129 = scmp.eq.s32.totalorder %s17, 0
      %p130 = por %p128, %p129
      %p131 = scmp.ne.s32.totalorder %s120, %s123
      %p132 = scmp.eq.s32.totalorder %s22, 3
      %p133 = por %p131, %p132
      %p134 = scmp.ne.s32.totalorder %s123, %s124
      %p135 = scmp.eq.s32.totalorder %s22, 0
      %p136 = por %p134, %p135
      %p137 = scmp.ne.s32.totalorder %s123, %s124
      %p138 = scmp.eq.s32.totalorder %s23, 3
      %p139 = por %p137, %p138
      %p141 = scmp.ne.s32.totalorder %s124, %s140
      %p142 = scmp.eq.s32.totalorder %s23, 0
      %p143 = por %p141, %p142
      %s144 = ssub.s32 %s24, %s36
      %p145 = scmp.eq.s32.totalorder %s144, 0
      %s147 = sadd.s32 %s146, 1
      %s148 = scalar_select %p145, %s146, %s147
      %p151 = pneg %p145
      %p152 = scmp.eq.s32.totalorder %s17, 3
      %p153 = por %p151, %p152
      %p154 = scmp.ne.s32.totalorder %s146, %s149
      %p155 = scmp.eq.s32.totalorder %s17, 0
      %p156 = por %p154, %p155
      %p157 = scmp.ne.s32.totalorder %s146, %s149
      %p158 = scmp.eq.s32.totalorder %s22, 3
      %p159 = por %p157, %p158
      %p160 = scmp.ne.s32.totalorder %s149, %s150
      %p161 = scmp.eq.s32.totalorder %s22, 0
      %p162 = por %p160, %p161
      %p163 = scmp.ne.s32.totalorder %s149, %s150
      %p164 = scmp.eq.s32.totalorder %s23, 3
      %p165 = por %p163, %p164
      %p167 = scmp.ne.s32.totalorder %s150, %s166
      %p168 = scmp.eq.s32.totalorder %s23, 0
      %p169 = por %p167, %p168
      %p170 = scmp.le.s32.totalorder 1, %s17
      %p171 = scmp.lt.s32.totalorder %s17, 5
      %p172 = pnand %p170, %p171
      %p173 = pneg %p172
      // Predicated region
      $region9: #{tpu_custom_call.1} parent=5 // pred_check
        _
      $region10: #{tpu_custom_call.1} parent=5 // pred_check_branch
        %175 = sbr.rel (%p172) target = $region12
      $region11: #{tpu_custom_call.1} parent=5 // pred_region
        %s176 = ssub.s32 %s17, 1
        // Predicated region
        $region13: #{tpu_custom_call.1} parent=11 // pred_check
          %p177 = pneg %p80
        $region14: #{tpu_custom_call.1} parent=11 // pred_check_branch
          %179 = sbr.rel (%p177) target = $region16
        $region15: #{tpu_custom_call.1} parent=11 // pred_region
          _
        $region16: #{tpu_custom_call.1} parent=11 // pred_fallthru
          _
      $region12: #{tpu_custom_call.1} parent=5 // pred_fallthru
        _
      %p180 = scmp.lt.s32.totalorder %s17, 4
      // Predicated region
      $region17: #{tpu_custom_call.1} parent=5 // pred_check
        %p181 = pneg %p180
      $region18: #{tpu_custom_call.1} parent=5 // pred_check_branch
        %183 = sbr.rel (%p181) target = $region20
      $region19: #{tpu_custom_call.1} parent=5 // pred_region
        // Predicated region
        $region21: #{tpu_custom_call.1} parent=19 // pred_check
          %p184 = pneg %p53
        $region22: #{tpu_custom_call.1} parent=19 // pred_check_branch
          %186 = sbr.rel (%p184) target = $region24
        $region23: #{tpu_custom_call.1} parent=19 // pred_region
          %s187 = smul.u32 %s24, 2
          %s188 = sadd.s32 %s187, %s25
          %s189 = smul.u32 64, %s188
          %p190 = scmp.lt.s32.totalorder %s189, 255
          %s191 = scalar_select %p190, %s189, 255
          %s192 = smul.addr %s191, 4
          %s193 = scalar_lea.vmem %s0, %s192
          %s194 = smul.u32 %s24, 2
          %s195 = sadd.s32 %s194, %s25
          %s196 = smul.u32 64, %s195
        $region24: #{tpu_custom_call.1} parent=19 // pred_fallthru
          _
      $region20: #{tpu_custom_call.1} parent=5 // pred_fallthru
        _
      %p197 = scmp.le.s32.totalorder 1, %s17
      %p198 = scmp.lt.s32.totalorder %s17, 5
      %p199 = pnand %p197, %p198
      %p200 = pneg %p199
      // Predicated region
      $region25: #{tpu_custom_call.1} parent=5 // pred_check
        _
      $region26: #{tpu_custom_call.1} parent=5 // pred_check_branch
        %202 = sbr.rel (%p199) target = $region28
      $region27: #{tpu_custom_call.1} parent=5 // pred_region
        %s203 = ssub.s32 %s17, 1
        %s204 = smul.u32 %s26, 2
        %s205 = sadd.s32 %s204, %s27
        %s206 = smul.u32 64, %s205
        %p207 = scmp.lt.s32.totalorder %s206, 255
        %s208 = scalar_select %p207, %s206, 255
        %s209 = smul.addr %s208, 4
        %s210 = scalar_lea.vmem %s0, %s209
        %p211 = pneg %p59
        %p212 = pneg %p56
        %p213 = pneg %p80
        %p214 = pneg %p77
        %p215 = pneg %p110
        %p216 = pneg %p107
        %s217 = sand.u32 %s97, 1
        %s218 = scalar_lea.sflag [#allocation3], %s217
        %s219 = sand.u32 %s97, 1
        %s220 = smul.addr %s219, 256
        %s221 = scalar_lea.vmem [#allocation2], %s220
        %p222 = pneg %p136
        %p223 = pneg %p133
        %s224 = sand.u32 %s22, 1
        %s225 = scalar_lea.sflag [#allocation5], %s224
        %s226 = sand.u32 %s123, 1
        %s227 = smul.addr %s226, 8
        %s228 = scalar_lea.vmem [#allocation4], %s227
        %p229 = pneg %p162
        %p230 = pneg %p159
        %s231 = sand.u32 %s22, 1
        %s232 = scalar_lea.sflag [#allocation5], %s231
        %s233 = sand.u32 %s149, 1
        %s234 = smul.addr %s233, 8
        %s235 = scalar_lea.vmem [#allocation6], %s234
        %s236 = smul.u32 %s26, 2
        %s237 = sadd.s32 %s236, %s27
        %s238 = smul.u32 64, %s237
        %p239 = scmp.lt.s32.totalorder %s238, 255
        %s240 = scalar_select %p239, %s238, 255
        %s241 = smul.addr %s240, 4
        %s242 = scalar_lea.vmem %s0, %s241
        %s243 = smul.u32 %s26, 2
        %s244 = sadd.s32 %s243, %s27
        %s245 = smul.u32 64, %s244
        %s246 = smul.u32 %s26, 2
        %s247 = sadd.s32 %s246, %s27
        %s248 = smul.u32 64, %s247
        %p250 = scmp.eq.s32.totalorder %s27, 0
        // Predicated region
        $region29: #{tpu_custom_call.1} parent=27 // pred_check
          %p251 = pneg %p250
        $region30: #{tpu_custom_call.1} parent=27 // pred_check_branch
          %253 = sbr.rel (%p251) target = $region32
        $region31: #{tpu_custom_call.1} parent=27 // pred_region
          %254 = vst [vmem:[%s228] sm:$0xff] 0.0
          %255 = vst [vmem:[%s235] sm:$0xff] 0.0
        $region32: #{tpu_custom_call.1} parent=27 // pred_fallthru
          _
        %v256 = vld [vmem:[%s242] sm:$0xf]
        %v257 = vld [vmem:[%s242 + $0x4] sm:$0xf]
        %v258 = vld [vmem:[%s242 + $0x8] sm:$0xf]
        %v259 = vld [vmem:[%s242 + $0xc] sm:$0xf]
        %v260 = vld [vmem:[%s242 + $0x10] sm:$0xf]
        %v261 = vld [vmem:[%s242 + $0x14] sm:$0xf]
        %v262 = vld [vmem:[%s242 + $0x18] sm:$0xf]
        %v263 = vld [vmem:[%s242 + $0x1c] sm:$0xf]
        %v264 = vld [vmem:[%s242 + $0x20] sm:$0xf]
        %v265 = vld [vmem:[%s242 + $0x24] sm:$0xf]
        %v266 = vld [vmem:[%s242 + $0x28] sm:$0xf]
        %v267 = vld [vmem:[%s242 + $0x2c] sm:$0xf]
        %v268 = vld [vmem:[%s242 + $0x30] sm:$0xf]
        %v269 = vld [vmem:[%s242 + $0x34] sm:$0xf]
        %v270 = vld [vmem:[%s242 + $0x38] sm:$0xf]
        %v271 = vld [vmem:[%s242 + $0x3c] sm:$0xf]
        %v272 = vld [vmem:[%s242 + $0x40] sm:$0xf]
        %v273 = vld [vmem:[%s242 + $0x44] sm:$0xf]
        %v274 = vld [vmem:[%s242 + $0x48] sm:$0xf]
        %v275 = vld [vmem:[%s242 + $0x4c] sm:$0xf]
        %v276 = vld [vmem:[%s242 + $0x50] sm:$0xf]
        %v277 = vld [vmem:[%s242 + $0x54] sm:$0xf]
        %v278 = vld [vmem:[%s242 + $0x58] sm:$0xf]
        %v279 = vld [vmem:[%s242 + $0x5c] sm:$0xf]
        %v280 = vld [vmem:[%s242 + $0x60] sm:$0xf]
        %v281 = vld [vmem:[%s242 + $0x64] sm:$0xf]
        %v282 = vld [vmem:[%s242 + $0x68] sm:$0xf]
        %v283 = vld [vmem:[%s242 + $0x6c] sm:$0xf]
        %v284 = vld [vmem:[%s242 + $0x70] sm:$0xf]
        %v285 = vld [vmem:[%s242 + $0x74] sm:$0xf]
        %v286 = vld [vmem:[%s242 + $0x78] sm:$0xf]
        %v287 = vld [vmem:[%s242 + $0x7c] sm:$0xf]
        %v288 = vld [vmem:[%s242 + $0x80] sm:$0xf]
        %v289 = vld [vmem:[%s242 + $0x84] sm:$0xf]
        %v290 = vld [vmem:[%s242 + $0x88] sm:$0xf]
        %v291 = vld [vmem:[%s242 + $0x8c] sm:$0xf]
        %v292 = vld [vmem:[%s242 + $0x90] sm:$0xf]
        %v293 = vld [vmem:[%s242 + $0x94] sm:$0xf]
        %v294 = vld [vmem:[%s242 + $0x98] sm:$0xf]
        %v295 = vld [vmem:[%s242 + $0x9c] sm:$0xf]
        %v296 = vld [vmem:[%s242 + $0xa0] sm:$0xf]
        %v297 = vld [vmem:[%s242 + $0xa4] sm:$0xf]
        %v298 = vld [vmem:[%s242 + $0xa8] sm:$0xf]
        %v299 = vld [vmem:[%s242 + $0xac] sm:$0xf]
        %v300 = vld [vmem:[%s242 + $0xb0] sm:$0xf]
        %v301 = vld [vmem:[%s242 + $0xb4] sm:$0xf]
        %v302 = vld [vmem:[%s242 + $0xb8] sm:$0xf]
        %v303 = vld [vmem:[%s242 + $0xbc] sm:$0xf]
        %v304 = vld [vmem:[%s242 + $0xc0] sm:$0xf]
        %v305 = vld [vmem:[%s242 + $0xc4] sm:$0xf]
        %v306 = vld [vmem:[%s242 + $0xc8] sm:$0xf]
        %v307 = vld [vmem:[%s242 + $0xcc] sm:$0xf]
        %v308 = vld [vmem:[%s242 + $0xd0] sm:$0xf]
        %v309 = vld [vmem:[%s242 + $0xd4] sm:$0xf]
        %v310 = vld [vmem:[%s242 + $0xd8] sm:$0xf]
        %v311 = vld [vmem:[%s242 + $0xdc] sm:$0xf]
        %v312 = vld [vmem:[%s242 + $0xe0] sm:$0xf]
        %v313 = vld [vmem:[%s242 + $0xe4] sm:$0xf]
        %v314 = vld [vmem:[%s242 + $0xe8] sm:$0xf]
        %v315 = vld [vmem:[%s242 + $0xec] sm:$0xf]
        %v316 = vld [vmem:[%s242 + $0xf0] sm:$0xf]
        %v317 = vld [vmem:[%s242 + $0xf4] sm:$0xf]
        %v318 = vld [vmem:[%s242 + $0xf8] sm:$0xf]
        %v319 = vld [vmem:[%s242 + $0xfc] sm:$0xf]
        %v320 = vld [vmem:[%s1] sm:$0xf]
        %v321 = vld [vmem:[%s1 + $0x4] sm:$0xf]
        %v322 = vld [vmem:[%s1 + $0x8] sm:$0xf]
        %v323 = vld [vmem:[%s1 + $0xc] sm:$0xf]
        %v324 = vld [vmem:[%s1 + $0x10] sm:$0x3]
        %v389 = vunpack.c.l.b16 %v256
        %v390 = vunpack.c.l.b16 %v257
        %v391 = vunpack.c.l.b16 %v258
        %v392 = vunpack.c.l.b16 %v259
        %v393 = vunpack.c.l.b16 %v260
        %v394 = vunpack.c.l.b16 %v261
        %v395 = vunpack.c.l.b16 %v262
        %v396 = vunpack.c.l.b16 %v263
        %v397 = vunpack.c.l.b16 %v264
        %v398 = vunpack.c.l.b16 %v265
        %v399 = vunpack.c.l.b16 %v266
        %v400 = vunpack.c.l.b16 %v267
        %v401 = vunpack.c.l.b16 %v268
        %v402 = vunpack.c.l.b16 %v269
        %v403 = vunpack.c.l.b16 %v270
        %v404 = vunpack.c.l.b16 %v271
        %v405 = vunpack.c.l.b16 %v272
        %v406 = vunpack.c.l.b16 %v273
        %v407 = vunpack.c.l.b16 %v274
        %v408 = vunpack.c.l.b16 %v275
        %v409 = vunpack.c.l.b16 %v276
        %v410 = vunpack.c.l.b16 %v277
        %v411 = vunpack.c.l.b16 %v278
        %v412 = vunpack.c.l.b16 %v279
        %v413 = vunpack.c.l.b16 %v280
        %v414 = vunpack.c.l.b16 %v281
        %v415 = vunpack.c.l.b16 %v282
        %v416 = vunpack.c.l.b16 %v283
        %v417 = vunpack.c.l.b16 %v284
        %v418 = vunpack.c.l.b16 %v285
        %v419 = vunpack.c.l.b16 %v286
        %v420 = vunpack.c.l.b16 %v287
        %v421 = vunpack.c.l.b16 %v288
        %v422 = vunpack.c.l.b16 %v289
        %v423 = vunpack.c.l.b16 %v290
        %v424 = vunpack.c.l.b16 %v291
        %v425 = vunpack.c.l.b16 %v292
        %v426 = vunpack.c.l.b16 %v293
        %v427 = vunpack.c.l.b16 %v294
        %v428 = vunpack.c.l.b16 %v295
        %v429 = vunpack.c.l.b16 %v296
        %v430 = vunpack.c.l.b16 %v297
        %v431 = vunpack.c.l.b16 %v298
        %v432 = vunpack.c.l.b16 %v299
        %v433 = vunpack.c.l.b16 %v300
        %v434 = vunpack.c.l.b16 %v301
        %v435 = vunpack.c.l.b16 %v302
        %v436 = vunpack.c.l.b16 %v303
        %v437 = vunpack.c.l.b16 %v304
        %v438 = vunpack.c.l.b16 %v305
        %v439 = vunpack.c.l.b16 %v306
        %v440 = vunpack.c.l.b16 %v307
        %v441 = vunpack.c.l.b16 %v308
        %v442 = vunpack.c.l.b16 %v309
        %v443 = vunpack.c.l.b16 %v310
        %v444 = vunpack.c.l.b16 %v311
        %v445 = vunpack.c.l.b16 %v312
        %v446 = vunpack.c.l.b16 %v313
        %v447 = vunpack.c.l.b16 %v314
        %v448 = vunpack.c.l.b16 %v315
        %v449 = vunpack.c.l.b16 %v316
        %v450 = vunpack.c.l.b16 %v317
        %v451 = vunpack.c.l.b16 %v318
        %v452 = vunpack.c.l.b16 %v319
        %v453 = vpack.c.b16 %v390, %v389
        %v454 = vpack.c.b16 %v392, %v391
        %v455 = vpack.c.b16 %v394, %v393
        %v456 = vpack.c.b16 %v396, %v395
        %v457 = vpack.c.b16 %v398, %v397
        %v458 = vpack.c.b16 %v400, %v399
        %v459 = vpack.c.b16 %v402, %v401
        %v460 = vpack.c.b16 %v404, %v403
        %v461 = vpack.c.b16 %v406, %v405
        %v462 = vpack.c.b16 %v408, %v407
        %v463 = vpack.c.b16 %v410, %v409
        %v464 = vpack.c.b16 %v412, %v411
        %v465 = vpack.c.b16 %v414, %v413
        %v466 = vpack.c.b16 %v416, %v415
        %v467 = vpack.c.b16 %v418, %v417
        %v468 = vpack.c.b16 %v420, %v419
        %v469 = vpack.c.b16 %v422, %v421
        %v470 = vpack.c.b16 %v424, %v423
        %v471 = vpack.c.b16 %v426, %v425
        %v472 = vpack.c.b16 %v428, %v427
        %v473 = vpack.c.b16 %v430, %v429
        %v474 = vpack.c.b16 %v432, %v431
        %v475 = vpack.c.b16 %v434, %v433
        %v476 = vpack.c.b16 %v436, %v435
        %v477 = vpack.c.b16 %v438, %v437
        %v478 = vpack.c.b16 %v440, %v439
        %v479 = vpack.c.b16 %v442, %v441
        %v480 = vpack.c.b16 %v444, %v443
        %v481 = vpack.c.b16 %v446, %v445
        %v482 = vpack.c.b16 %v448, %v447
        %v483 = vpack.c.b16 %v450, %v449
        %v484 = vpack.c.b16 %v452, %v451
        %v490 = vunpack.c.l.b16 %v320
        %v491 = vunpack.c.l.b16 %v321
        %v492 = vunpack.c.l.b16 %v322
        %v493 = vunpack.c.l.b16 %v323
        %v494 = vunpack.c.l.b16 %v324
        %v495 = vpack.c.b16 %v491, %v490
        %v496 = vpack.c.b16 %v493, %v492
        %v497 = vpack.c.b16 %v494, %v494
        %vm500 = vcmask 293888
        %v502 = vsel %vm500, %v453, 0
        %v505 = vsel %vm500, %v454, 0
        %v508 = vsel %vm500, %v455, 0
        %v511 = vsel %vm500, %v456, 0
        %v514 = vsel %vm500, %v457, 0
        %v517 = vsel %vm500, %v458, 0
        %v520 = vsel %vm500, %v459, 0
        %v523 = vsel %vm500, %v460, 0
        %v526 = vsel %vm500, %v461, 0
        %v529 = vsel %vm500, %v462, 0
        %v532 = vsel %vm500, %v463, 0
        %v535 = vsel %vm500, %v464, 0
        %v538 = vsel %vm500, %v465, 0
        %v541 = vsel %vm500, %v466, 0
        %v544 = vsel %vm500, %v467, 0
        %v547 = vsel %vm500, %v468, 0
        %v550 = vsel %vm500, %v469, 0
        %v553 = vsel %vm500, %v470, 0
        %v556 = vsel %vm500, %v471, 0
        %v559 = vsel %vm500, %v472, 0
        %v562 = vsel %vm500, %v473, 0
        %v565 = vsel %vm500, %v474, 0
        %v568 = vsel %vm500, %v475, 0
        %v571 = vsel %vm500, %v476, 0
        %v574 = vsel %vm500, %v477, 0
        %v577 = vsel %vm500, %v478, 0
        %v580 = vsel %vm500, %v479, 0
        %v583 = vsel %vm500, %v480, 0
        %v586 = vsel %vm500, %v481, 0
        %v589 = vsel %vm500, %v482, 0
        %v592 = vsel %vm500, %v483, 0
        %v595 = vsel %vm500, %v484, 0
        %vm597 = vcmask 1041408
        %v599 = vsel %vm597, %v497, 0
        %601 = vmatprep.subr.bf16.mxu0 0
        %602 = vmatpush1.bf16.msra.mxu0 %v495
        %603 = vmatprep.subr.bf16.mxu0 0
        %604 = vmatpush1.bf16.msra.mxu0 %v496
        %605 = vmatprep.subr.bf16.mxu0 0
        %606 = vmatpush1.bf16.msra.mxu0 %v599
        %607 = vmatprep.subr.bf16.mxu0 0
        %608 = vmatpush1.bf16.msra.mxu0 0
        %609 = vmatprep.subr.bf16.mxu0 0
        %610 = vmatpush1.bf16.msra.mxu0 0
        %611 = vmatprep.subr.bf16.mxu0 0
        %612 = vmatpush1.bf16.msra.mxu0 0
        %613 = vmatprep.subr.bf16.mxu0 0
        %614 = vmatpush1.bf16.msra.mxu0 0
        %615 = vmatprep.subr.bf16.mxu0 0
        %616 = vmatpush1.bf16.msra.mxu0 0
        %617 = vmatprep.subr.bf16.mxu0 0
        %618 = vmatpush1.bf16.msra.mxu0 0
        %619 = vmatprep.subr.bf16.mxu0 0
        %620 = vmatpush1.bf16.msra.mxu0 0
        %621 = vmatprep.subr.bf16.mxu0 0
        %622 = vmatpush1.bf16.msra.mxu0 0
        %623 = vmatprep.subr.bf16.mxu0 0
        %624 = vmatpush1.bf16.msra.mxu0 0
        %625 = vmatprep.subr.bf16.mxu0 0
        %626 = vmatpush1.bf16.msra.mxu0 0
        %627 = vmatprep.subr.bf16.mxu0 0
        %628 = vmatpush1.bf16.msra.mxu0 0
        %629 = vmatprep.subr.bf16.mxu0 0
        %630 = vmatpush1.bf16.msra.mxu0 0
        %631 = vmatprep.subr.bf16.mxu0 0
        %632 = vmatpush1.bf16.msra.mxu0 0
        %633 = vmatprep.mubr.bf16.mxu0 0
        %634 = vmatmul.mubr.bf16.gmra.mrb[0].mxu0 %v502
        %v635 = vpop.f32.mrb[0].mxu0
        %v636 = vadd.f32 0.0, %v635
        %v637 = vpop.f32.mrb[0].mxu0
        %v638 = vpop.f32.mrb[0].mxu0
        %v639 = vadd.f32 0.0, %v638
        %v640 = vpop.f32.mrb[0].mxu0
        %641 = vmatprep.mubr.bf16.mxu0 0
        %642 = vmatmul.mubr.bf16.gmra.mrb[0].mxu0 %v505
        %v643 = vpop.f32.mrb[0].mxu0
        %v644 = vadd.f32 0.0, %v643
        %v645 = vpop.f32.mrb[0].mxu0
        %v646 = vpop.f32.mrb[0].mxu0
        %v647 = vadd.f32 0.0, %v646
        %v648 = vpop.f32.mrb[0].mxu0
        %649 = vmatprep.mubr.bf16.mxu0 0
        %650 = vmatmul.mubr.bf16.gmra.mrb[0].mxu0 %v508
        %v651 = vpop.f32.mrb[0].mxu0
        %v652 = vadd.f32 0.0, %v651
        %v653 = vpop.f32.mrb[0].mxu0
        %v654 = vpop.f32.mrb[0].mxu0
        %v655 = vadd.f32 0.0, %v654
        %v656 = vpop.f32.mrb[0].mxu0
        %657 = vmatprep.mubr.bf16.mxu0 0
        %658 = vmatmul.mubr.bf16.gmra.mrb[0].mxu0 %v511
        %v659 = vpop.f32.mrb[0].mxu0
        %v660 = vadd.f32 0.0, %v659
        %v661 = vpop.f32.mrb[0].mxu0
        %v662 = vpop.f32.mrb[0].mxu0
        %v663 = vadd.f32 0.0, %v662
        %v664 = vpop.f32.mrb[0].mxu0
        %665 = vmatprep.mubr.bf16.mxu0 0
        %666 = vmatmul.mubr.bf16.gmra.mrb[0].mxu0 %v514
        %v667 = vpop.f32.mrb[0].mxu0
        %v668 = vadd.f32 0.0, %v667
        %v669 = vpop.f32.mrb[0].mxu0
        %v670 = vpop.f32.mrb[0].mxu0
        %v671 = vadd.f32 0.0, %v670
        %v672 = vpop.f32.mrb[0].mxu0
        %673 = vmatprep.mubr.bf16.mxu0 0
        %674 = vmatmul.mubr.bf16.gmra.mrb[0].mxu0 %v517
        %v675 = vpop.f32.mrb[0].mxu0
        %v676 = vadd.f32 0.0, %v675
        %v677 = vpop.f32.mrb[0].mxu0
        %v678 = vpop.f32.mrb[0].mxu0
        %v679 = vadd.f32 0.0, %v678
        %v680 = vpop.f32.mrb[0].mxu0
        %681 = vmatprep.mubr.bf16.mxu0 0
        %682 = vmatmul.mubr.bf16.gmra.mrb[0].mxu0 %v520
        %v683 = vpop.f32.mrb[0].mxu0
        %v684 = vadd.f32 0.0, %v683
        %v685 = vpop.f32.mrb[0].mxu0
        %v686 = vpop.f32.mrb[0].mxu0
        %v687 = vadd.f32 0.0, %v686
        %v688 = vpop.f32.mrb[0].mxu0
        %689 = vmatprep.mubr.bf16.mxu0 0
        %690 = vmatmul.mubr.bf16.gmra.mrb[0].mxu0 %v523
        %v691 = vpop.f32.mrb[0].mxu0
        %v692 = vadd.f32 0.0, %v691
        %v693 = vpop.f32.mrb[0].mxu0
        %v694 = vpop.f32.mrb[0].mxu0
        %v695 = vadd.f32 0.0, %v694
        %v696 = vpop.f32.mrb[0].mxu0
        %697 = vmatprep.mubr.bf16.mxu0 0
        %698 = vmatmul.mubr.bf16.gmra.mrb[0].mxu0 %v526
        %v699 = vpop.f32.mrb[0].mxu0
        %v700 = vadd.f32 0.0, %v699
        %v701 = vpop.f32.mrb[0].mxu0
        %v702 = vpop.f32.mrb[0].mxu0
        %v703 = vadd.f32 0.0, %v702
        %v704 = vpop.f32.mrb[0].mxu0
        %705 = vmatprep.mubr.bf16.mxu0 0
        %706 = vmatmul.mubr.bf16.gmra.mrb[0].mxu0 %v529
        %v707 = vpop.f32.mrb[0].mxu0
        %v708 = vadd.f32 0.0, %v707
        %v709 = vpop.f32.mrb[0].mxu0
        %v710 = vpop.f32.mrb[0].mxu0
        %v711 = vadd.f32 0.0, %v710
        %v712 = vpop.f32.mrb[0].mxu0
        %713 = vmatprep.mubr.bf16.mxu0 0
        %714 = vmatmul.mubr.bf16.gmra.mrb[0].mxu0 %v532
        %v715 = vpop.f32.mrb[0].mxu0
        %v716 = vadd.f32 0.0, %v715
        %v717 = vpop.f32.mrb[0].mxu0
        %v718 = vpop.f32.mrb[0].mxu0
        %v719 = vadd.f32 0.0, %v718
        %v720 = vpop.f32.mrb[0].mxu0
        %721 = vmatprep.mubr.bf16.mxu0 0
        %722 = vmatmul.mubr.bf16.gmra.mrb[0].mxu0 %v535
        %v723 = vpop.f32.mrb[0].mxu0
        %v724 = vadd.f32 0.0, %v723
        %v725 = vpop.f32.mrb[0].mxu0
        %v726 = vpop.f32.mrb[0].mxu0
        %v727 = vadd.f32 0.0, %v726
        %v728 = vpop.f32.mrb[0].mxu0
        %729 = vmatprep.mubr.bf16.mxu0 0
        %730 = vmatmul.mubr.bf16.gmra.mrb[0].mxu0 %v538
        %v731 = vpop.f32.mrb[0].mxu0
        %v732 = vadd.f32 0.0, %v731
        %v733 = vpop.f32.mrb[0].mxu0
        %v734 = vpop.f32.mrb[0].mxu0
        %v735 = vadd.f32 0.0, %v734
        %v736 = vpop.f32.mrb[0].mxu0
        %737 = vmatprep.mubr.bf16.mxu0 0
        %738 = vmatmul.mubr.bf16.gmra.mrb[0].mxu0 %v541
        %v739 = vpop.f32.mrb[0].mxu0
        %v740 = vadd.f32 0.0, %v739
        %v741 = vpop.f32.mrb[0].mxu0
        %v742 = vpop.f32.mrb[0].mxu0
        %v743 = vadd.f32 0.0, %v742
        %v744 = vpop.f32.mrb[0].mxu0
        %745 = vmatprep.mubr.bf16.mxu0 0
        %746 = vmatmul.mubr.bf16.gmra.mrb[0].mxu0 %v544
        %v747 = vpop.f32.mrb[0].mxu0
        %v748 = vadd.f32 0.0, %v747
        %v749 = vpop.f32.mrb[0].mxu0
        %v750 = vpop.f32.mrb[0].mxu0
        %v751 = vadd.f32 0.0, %v750
        %v752 = vpop.f32.mrb[0].mxu0
        %753 = vmatprep.mubr.bf16.mxu0 0
        %754 = vmatmul.mubr.bf16.gmra.mrb[0].mxu0 %v547
        %v755 = vpop.f32.mrb[0].mxu0
        %v756 = vadd.f32 0.0, %v755
        %v757 = vpop.f32.mrb[0].mxu0
        %v758 = vpop.f32.mrb[0].mxu0
        %v759 = vadd.f32 0.0, %v758
        %v760 = vpop.f32.mrb[0].mxu0
        %761 = vmatprep.mubr.bf16.mxu0 0
        %762 = vmatmul.mubr.bf16.gmra.mrb[0].mxu0 %v550
        %v763 = vpop.f32.mrb[0].mxu0
        %v764 = vadd.f32 0.0, %v763
        %v765 = vpop.f32.mrb[0].mxu0
        %v766 = vpop.f32.mrb[0].mxu0
        %v767 = vadd.f32 0.0, %v766
        %v768 = vpop.f32.mrb[0].mxu0
        %769 = vmatprep.mubr.bf16.mxu0 0
        %770 = vmatmul.mubr.bf16.gmra.mrb[0].mxu0 %v553
        %v771 = vpop.f32.mrb[0].mxu0
        %v772 = vadd.f32 0.0, %v771
        %v773 = vpop.f32.mrb[0].mxu0
        %v774 = vpop.f32.mrb[0].mxu0
        %v775 = vadd.f32 0.0, %v774
        %v776 = vpop.f32.mrb[0].mxu0
        %777 = vmatprep.mubr.bf16.mxu0 0
        %778 = vmatmul.mubr.bf16.gmra.mrb[0].mxu0 %v556
        %v779 = vpop.f32.mrb[0].mxu0
        %v780 = vadd.f32 0.0, %v779
        %v781 = vpop.f32.mrb[0].mxu0
        %v782 = vpop.f32.mrb[0].mxu0
        %v783 = vadd.f32 0.0, %v782
        %v784 = vpop.f32.mrb[0].mxu0
        %785 = vmatprep.mubr.bf16.mxu0 0
        %786 = vmatmul.mubr.bf16.gmra.mrb[0].mxu0 %v559
        %v787 = vpop.f32.mrb[0].mxu0
        %v788 = vadd.f32 0.0, %v787
        %v789 = vpop.f32.mrb[0].mxu0
        %v790 = vpop.f32.mrb[0].mxu0
        %v791 = vadd.f32 0.0, %v790
        %v792 = vpop.f32.mrb[0].mxu0
        %793 = vmatprep.mubr.bf16.mxu0 0
        %794 = vmatmul.mubr.bf16.gmra.mrb[0].mxu0 %v562
        %v795 = vpop.f32.mrb[0].mxu0
        %v796 = vadd.f32 0.0, %v795
        %v797 = vpop.f32.mrb[0].mxu0
        %v798 = vpop.f32.mrb[0].mxu0
        %v799 = vadd.f32 0.0, %v798
        %v800 = vpop.f32.mrb[0].mxu0
        %801 = vmatprep.mubr.bf16.mxu0 0
        %802 = vmatmul.mubr.bf16.gmra.mrb[0].mxu0 %v565
        %v803 = vpop.f32.mrb[0].mxu0
        %v804 = vadd.f32 0.0, %v803
        %v805 = vpop.f32.mrb[0].mxu0
        %v806 = vpop.f32.mrb[0].mxu0
        %v807 = vadd.f32 0.0, %v806
        %v808 = vpop.f32.mrb[0].mxu0
        %809 = vmatprep.mubr.bf16.mxu0 0
        %810 = vmatmul.mubr.bf16.gmra.mrb[0].mxu0 %v568
        %v811 = vpop.f32.mrb[0].mxu0
        %v812 = vadd.f32 0.0, %v811
        %v813 = vpop.f32.mrb[0].mxu0
        %v814 = vpop.f32.mrb[0].mxu0
        %v815 = vadd.f32 0.0, %v814
        %v816 = vpop.f32.mrb[0].mxu0
        %817 = vmatprep.mubr.bf16.mxu0 0
        %818 = vmatmul.mubr.bf16.gmra.mrb[0].mxu0 %v571
        %v819 = vpop.f32.mrb[0].mxu0
        %v820 = vadd.f32 0.0, %v819
        %v821 = vpop.f32.mrb[0].mxu0
        %v822 = vpop.f32.mrb[0].mxu0
        %v823 = vadd.f32 0.0, %v822
        %v824 = vpop.f32.mrb[0].mxu0
        %825 = vmatprep.mubr.bf16.mxu0 0
        %826 = vmatmul.mubr.bf16.gmra.mrb[0].mxu0 %v574
        %v827 = vpop.f32.mrb[0].mxu0
        %v828 = vadd.f32 0.0, %v827
        %v829 = vpop.f32.mrb[0].mxu0
        %v830 = vpop.f32.mrb[0].mxu0
        %v831 = vadd.f32 0.0, %v830
        %v832 = vpop.f32.mrb[0].mxu0
        %833 = vmatprep.mubr.bf16.mxu0 0
        %834 = vmatmul.mubr.bf16.gmra.mrb[0].mxu0 %v577
        %v835 = vpop.f32.mrb[0].mxu0
        %v836 = vadd.f32 0.0, %v835
        %v837 = vpop.f32.mrb[0].mxu0
        %v838 = vpop.f32.mrb[0].mxu0
        %v839 = vadd.f32 0.0, %v838
        %v840 = vpop.f32.mrb[0].mxu0
        %841 = vmatprep.mubr.bf16.mxu0 0
        %842 = vmatmul.mubr.bf16.gmra.mrb[0].mxu0 %v580
        %v843 = vpop.f32.mrb[0].mxu0
        %v844 = vadd.f32 0.0, %v843
        %v845 = vpop.f32.mrb[0].mxu0
        %v846 = vpop.f32.mrb[0].mxu0
        %v847 = vadd.f32 0.0, %v846
        %v848 = vpop.f32.mrb[0].mxu0
        %849 = vmatprep.mubr.bf16.mxu0 0
        %850 = vmatmul.mubr.bf16.gmra.mrb[0].mxu0 %v583
        %v851 = vpop.f32.mrb[0].mxu0
        %v852 = vadd.f32 0.0, %v851
        %v853 = vpop.f32.mrb[0].mxu0
        %v854 = vpop.f32.mrb[0].mxu0
        %v855 = vadd.f32 0.0, %v854
        %v856 = vpop.f32.mrb[0].mxu0
        %857 = vmatprep.mubr.bf16.mxu0 0
        %858 = vmatmul.mubr.bf16.gmra.mrb[0].mxu0 %v586
        %v859 = vpop.f32.mrb[0].mxu0
        %v860 = vadd.f32 0.0, %v859
        %v861 = vpop.f32.mrb[0].mxu0
        %v862 = vpop.f32.mrb[0].mxu0
        %v863 = vadd.f32 0.0, %v862
        %v864 = vpop.f32.mrb[0].mxu0
        %865 = vmatprep.mubr.bf16.mxu0 0
        %866 = vmatmul.mubr.bf16.gmra.mrb[0].mxu0 %v589
        %v867 = vpop.f32.mrb[0].mxu0
        %v868 = vadd.f32 0.0, %v867
        %v869 = vpop.f32.mrb[0].mxu0
        %v870 = vpop.f32.mrb[0].mxu0
        %v871 = vadd.f32 0.0, %v870
        %v872 = vpop.f32.mrb[0].mxu0
        %873 = vmatprep.mubr.bf16.mxu0 0
        %874 = vmatmul.mubr.bf16.gmra.mrb[0].mxu0 %v592
        %v875 = vpop.f32.mrb[0].mxu0
        %v876 = vadd.f32 0.0, %v875
        %v877 = vpop.f32.mrb[0].mxu0
        %v878 = vpop.f32.mrb[0].mxu0
        %v879 = vadd.f32 0.0, %v878
        %v880 = vpop.f32.mrb[0].mxu0
        %881 = vmatprep.mubr.bf16.mxu0 0
        %882 = vmatmul.mubr.bf16.gmra.mrb[0].mxu0 %v595
        %v883 = vpop.f32.mrb[0].mxu0
        %v884 = vadd.f32 0.0, %v883
        %v885 = vpop.f32.mrb[0].mxu0
        %v886 = vpop.f32.mrb[0].mxu0
        %v887 = vadd.f32 0.0, %v886
        %v888 = vpop.f32.mrb[0].mxu0
        %889 = vdwg.mxu0
        %v890 = vpack.c.bf16 %v639, %v636
        %v891 = vpack.c.bf16 %v647, %v644
        %v892 = vpack.c.bf16 %v655, %v652
        %v893 = vpack.c.bf16 %v663, %v660
        %v894 = vpack.c.bf16 %v671, %v668
        %v895 = vpack.c.bf16 %v679, %v676
        %v896 = vpack.c.bf16 %v687, %v684
        %v897 = vpack.c.bf16 %v695, %v692
        %v898 = vpack.c.bf16 %v703, %v700
        %v899 = vpack.c.bf16 %v711, %v708
        %v900 = vpack.c.bf16 %v719, %v716
        %v901 = vpack.c.bf16 %v727, %v724
        %v902 = vpack.c.bf16 %v735, %v732
        %v903 = vpack.c.bf16 %v743, %v740
        %v904 = vpack.c.bf16 %v751, %v748
        %v905 = vpack.c.bf16 %v759, %v756
        %v906 = vpack.c.bf16 %v767, %v764
        %v907 = vpack.c.bf16 %v775, %v772
        %v908 = vpack.c.bf16 %v783, %v780
        %v909 = vpack.c.bf16 %v791, %v788
        %v910 = vpack.c.bf16 %v799, %v796
        %v911 = vpack.c.bf16 %v807, %v804
        %v912 = vpack.c.bf16 %v815, %v812
        %v913 = vpack.c.bf16 %v823, %v820
        %v914 = vpack.c.bf16 %v831, %v828
        %v915 = vpack.c.bf16 %v839, %v836
        %v916 = vpack.c.bf16 %v847, %v844
        %v917 = vpack.c.bf16 %v855, %v852
        %v918 = vpack.c.bf16 %v863, %v860
        %v919 = vpack.c.bf16 %v871, %v868
        %v920 = vpack.c.bf16 %v879, %v876
        %v921 = vpack.c.bf16 %v887, %v884
        %v954 = vunpack.c.l.b16 %v890
        %v955 = vunpack.c.h.b16 %v890
        %v956 = vunpack.c.l.b16 %v891
        %v957 = vunpack.c.h.b16 %v891
        %v958 = vunpack.c.l.b16 %v892
        %v959 = vunpack.c.h.b16 %v892
        %v960 = vunpack.c.l.b16 %v893
        %v961 = vunpack.c.h.b16 %v893
        %v962 = vunpack.c.l.b16 %v894
        %v963 = vunpack.c.h.b16 %v894
        %v964 = vunpack.c.l.b16 %v895
        %v965 = vunpack.c.h.b16 %v895
        %v966 = vunpack.c.l.b16 %v896
        %v967 = vunpack.c.h.b16 %v896
        %v968 = vunpack.c.l.b16 %v897
        %v969 = vunpack.c.h.b16 %v897
        %v970 = vunpack.c.l.b16 %v898
        %v971 = vunpack.c.h.b16 %v898
        %v972 = vunpack.c.l.b16 %v899
        %v973 = vunpack.c.h.b16 %v899
        %v974 = vunpack.c.l.b16 %v900
        %v975 = vunpack.c.h.b16 %v900
        %v976 = vunpack.c.l.b16 %v901
        %v977 = vunpack.c.h.b16 %v901
        %v978 = vunpack.c.l.b16 %v902
        %v979 = vunpack.c.h.b16 %v902
        %v980 = vunpack.c.l.b16 %v903
        %v981 = vunpack.c.h.b16 %v903
        %v982 = vunpack.c.l.b16 %v904
        %v983 = vunpack.c.h.b16 %v904
        %v984 = vunpack.c.l.b16 %v905
        %v985 = vunpack.c.h.b16 %v905
        %v986 = vunpack.c.l.b16 %v906
        %v987 = vunpack.c.h.b16 %v906
        %v988 = vunpack.c.l.b16 %v907
        %v989 = vunpack.c.h.b16 %v907
        %v990 = vunpack.c.l.b16 %v908
        %v991 = vunpack.c.h.b16 %v908
        %v992 = vunpack.c.l.b16 %v909
        %v993 = vunpack.c.h.b16 %v909
        %v994 = vunpack.c.l.b16 %v910
        %v995 = vunpack.c.h.b16 %v910
        %v996 = vunpack.c.l.b16 %v911
        %v997 = vunpack.c.h.b16 %v911
        %v998 = vunpack.c.l.b16 %v912
        %v999 = vunpack.c.h.b16 %v912
        %v1000 = vunpack.c.l.b16 %v913
        %v1001 = vunpack.c.h.b16 %v913
        %v1002 = vunpack.c.l.b16 %v914
        %v1003 = vunpack.c.h.b16 %v914
        %v1004 = vunpack.c.l.b16 %v915
        %v1005 = vunpack.c.h.b16 %v915
        %v1006 = vunpack.c.l.b16 %v916
        %v1007 = vunpack.c.h.b16 %v916
        %v1008 = vunpack.c.l.b16 %v917
        %v1009 = vunpack.c.h.b16 %v917
        %v1010 = vunpack.c.l.b16 %v918
        %v1011 = vunpack.c.h.b16 %v918
        %v1012 = vunpack.c.l.b16 %v919
        %v1013 = vunpack.c.h.b16 %v919
        %v1014 = vunpack.c.l.b16 %v920
        %v1015 = vunpack.c.h.b16 %v920
        %v1016 = vunpack.c.l.b16 %v921
        %v1017 = vunpack.c.h.b16 %v921
        %v1018 = vpack.c.b16 %v954, %v954
        %v1019 = vpack.c.b16 %v955, %v955
        %v1020 = vpack.c.b16 %v956, %v956
        %v1021 = vpack.c.b16 %v957, %v957
        %v1022 = vpack.c.b16 %v958, %v958
        %v1023 = vpack.c.b16 %v959, %v959
        %v1024 = vpack.c.b16 %v960, %v960
        %v1025 = vpack.c.b16 %v961, %v961
        %v1026 = vpack.c.b16 %v962, %v962
        %v1027 = vpack.c.b16 %v963, %v963
        %v1028 = vpack.c.b16 %v964, %v964
        %v1029 = vpack.c.b16 %v965, %v965
        %v1030 = vpack.c.b16 %v966, %v966
        %v1031 = vpack.c.b16 %v967, %v967
        %v1032 = vpack.c.b16 %v968, %v968
        %v1033 = vpack.c.b16 %v969, %v969
        %v1034 = vpack.c.b16 %v970, %v970
        %v1035 = vpack.c.b16 %v971, %v971
        %v1036 = vpack.c.b16 %v972, %v972
        %v1037 = vpack.c.b16 %v973, %v973
        %v1038 = vpack.c.b16 %v974, %v974
        %v1039 = vpack.c.b16 %v975, %v975
        %v1040 = vpack.c.b16 %v976, %v976
        %v1041 = vpack.c.b16 %v977, %v977
        %v1042 = vpack.c.b16 %v978, %v978
        %v1043 = vpack.c.b16 %v979, %v979
        %v1044 = vpack.c.b16 %v980, %v980
        %v1045 = vpack.c.b16 %v981, %v981
        %v1046 = vpack.c.b16 %v982, %v982
        %v1047 = vpack.c.b16 %v983, %v983
        %v1048 = vpack.c.b16 %v984, %v984
        %v1049 = vpack.c.b16 %v985, %v985
        %v1050 = vpack.c.b16 %v986, %v986
        %v1051 = vpack.c.b16 %v987, %v987
        %v1052 = vpack.c.b16 %v988, %v988
        %v1053 = vpack.c.b16 %v989, %v989
        %v1054 = vpack.c.b16 %v990, %v990
        %v1055 = vpack.c.b16 %v991, %v991
        %v1056 = vpack.c.b16 %v992, %v992
        %v1057 = vpack.c.b16 %v993, %v993
        %v1058 = vpack.c.b16 %v994, %v994
        %v1059 = vpack.c.b16 %v995, %v995
        %v1060 = vpack.c.b16 %v996, %v996
        %v1061 = vpack.c.b16 %v997, %v997
        %v1062 = vpack.c.b16 %v998, %v998
        %v1063 = vpack.c.b16 %v999, %v999
        %v1064 = vpack.c.b16 %v1000, %v1000
        %v1065 = vpack.c.b16 %v1001, %v1001
        %v1066 = vpack.c.b16 %v1002, %v1002
        %v1067 = vpack.c.b16 %v1003, %v1003
        %v1068 = vpack.c.b16 %v1004, %v1004
        %v1069 = vpack.c.b16 %v1005, %v1005
        %v1070 = vpack.c.b16 %v1006, %v1006
        %v1071 = vpack.c.b16 %v1007, %v1007
        %v1072 = vpack.c.b16 %v1008, %v1008
        %v1073 = vpack.c.b16 %v1009, %v1009
        %v1074 = vpack.c.b16 %v1010, %v1010
        %v1075 = vpack.c.b16 %v1011, %v1011
        %v1076 = vpack.c.b16 %v1012, %v1012
        %v1077 = vpack.c.b16 %v1013, %v1013
        %v1078 = vpack.c.b16 %v1014, %v1014
        %v1079 = vpack.c.b16 %v1015, %v1015
        %v1080 = vpack.c.b16 %v1016, %v1016
        %v1081 = vpack.c.b16 %v1017, %v1017
        %1146 = vst [vmem:[%s221] sm:$0xf] %v1018
        %1147 = vst [vmem:[%s221 + $0x4] sm:$0xf] %v1019
        %1148 = vst [vmem:[%s221 + $0x8] sm:$0xf] %v1020
        %1149 = vst [vmem:[%s221 + $0xc] sm:$0xf] %v1021
        %1150 = vst [vmem:[%s221 + $0x10] sm:$0xf] %v1022
        %1151 = vst [vmem:[%s221 + $0x14] sm:$0xf] %v1023
        %1152 = vst [vmem:[%s221 + $0x18] sm:$0xf] %v1024
        %1153 = vst [vmem:[%s221 + $0x1c] sm:$0xf] %v1025
        %1154 = vst [vmem:[%s221 + $0x20] sm:$0xf] %v1026
        %1155 = vst [vmem:[%s221 + $0x24] sm:$0xf] %v1027
        %1156 = vst [vmem:[%s221 + $0x28] sm:$0xf] %v1028
        %1157 = vst [vmem:[%s221 + $0x2c] sm:$0xf] %v1029
        %1158 = vst [vmem:[%s221 + $0x30] sm:$0xf] %v1030
        %1159 = vst [vmem:[%s221 + $0x34] sm:$0xf] %v1031
        %1160 = vst [vmem:[%s221 + $0x38] sm:$0xf] %v1032
        %1161 = vst [vmem:[%s221 + $0x3c] sm:$0xf] %v1033
        %1162 = vst [vmem:[%s221 + $0x40] sm:$0xf] %v1034
        %1163 = vst [vmem:[%s221 + $0x44] sm:$0xf] %v1035
        %1164 = vst [vmem:[%s221 + $0x48] sm:$0xf] %v1036
        %1165 = vst [vmem:[%s221 + $0x4c] sm:$0xf] %v1037
        %1166 = vst [vmem:[%s221 + $0x50] sm:$0xf] %v1038
        %1167 = vst [vmem:[%s221 + $0x54] sm:$0xf] %v1039
        %1168 = vst [vmem:[%s221 + $0x58] sm:$0xf] %v1040
        %1169 = vst [vmem:[%s221 + $0x5c] sm:$0xf] %v1041
        %1170 = vst [vmem:[%s221 + $0x60] sm:$0xf] %v1042
        %1171 = vst [vmem:[%s221 + $0x64] sm:$0xf] %v1043
        %1172 = vst [vmem:[%s221 + $0x68] sm:$0xf] %v1044
        %1173 = vst [vmem:[%s221 + $0x6c] sm:$0xf] %v1045
        %1174 = vst [vmem:[%s221 + $0x70] sm:$0xf] %v1046
        %1175 = vst [vmem:[%s221 + $0x74] sm:$0xf] %v1047
        %1176 = vst [vmem:[%s221 + $0x78] sm:$0xf] %v1048
        %1177 = vst [vmem:[%s221 + $0x7c] sm:$0xf] %v1049
        %1178 = vst [vmem:[%s221 + $0x80] sm:$0xf] %v1050
        %1179 = vst [vmem:[%s221 + $0x84] sm:$0xf] %v1051
        %1180 = vst [vmem:[%s221 + $0x88] sm:$0xf] %v1052
        %1181 = vst [vmem:[%s221 + $0x8c] sm:$0xf] %v1053
        %1182 = vst [vmem:[%s221 + $0x90] sm:$0xf] %v1054
        %1183 = vst [vmem:[%s221 + $0x94] sm:$0xf] %v1055
        %1184 = vst [vmem:[%s221 + $0x98] sm:$0xf] %v1056
        %1185 = vst [vmem:[%s221 + $0x9c] sm:$0xf] %v1057
        %1186 = vst [vmem:[%s221 + $0xa0] sm:$0xf] %v1058
        %1187 = vst [vmem:[%s221 + $0xa4] sm:$0xf] %v1059
        %1188 = vst [vmem:[%s221 + $0xa8] sm:$0xf] %v1060
        %1189 = vst [vmem:[%s221 + $0xac] sm:$0xf] %v1061
        %1190 = vst [vmem:[%s221 + $0xb0] sm:$0xf] %v1062
        %1191 = vst [vmem:[%s221 + $0xb4] sm:$0xf] %v1063
        %1192 = vst [vmem:[%s221 + $0xb8] sm:$0xf] %v1064
        %1193 = vst [vmem:[%s221 + $0xbc] sm:$0xf] %v1065
        %1194 = vst [vmem:[%s221 + $0xc0] sm:$0xf] %v1066
        %1195 = vst [vmem:[%s221 + $0xc4] sm:$0xf] %v1067
        %1196 = vst [vmem:[%s221 + $0xc8] sm:$0xf] %v1068
        %1197 = vst [vmem:[%s221 + $0xcc] sm:$0xf] %v1069
        %1198 = vst [vmem:[%s221 + $0xd0] sm:$0xf] %v1070
        %1199 = vst [vmem:[%s221 + $0xd4] sm:$0xf] %v1071
        %1200 = vst [vmem:[%s221 + $0xd8] sm:$0xf] %v1072
        %1201 = vst [vmem:[%s221 + $0xdc] sm:$0xf] %v1073
        %1202 = vst [vmem:[%s221 + $0xe0] sm:$0xf] %v1074
        %1203 = vst [vmem:[%s221 + $0xe4] sm:$0xf] %v1075
        %1204 = vst [vmem:[%s221 + $0xe8] sm:$0xf] %v1076
        %1205 = vst [vmem:[%s221 + $0xec] sm:$0xf] %v1077
        %1206 = vst [vmem:[%s221 + $0xf0] sm:$0xf] %v1078
        %1207 = vst [vmem:[%s221 + $0xf4] sm:$0xf] %v1079
        %1208 = vst [vmem:[%s221 + $0xf8] sm:$0xf] %v1080
        %1209 = vst [vmem:[%s221 + $0xfc] sm:$0xf] %v1081
        %v1210 = vld [vmem:[%s228] sm:$0xff]
        %v1211 = vadd.f32 %v636, %v639
        %v1212 = vadd.f32 %v1211, %v644
        %v1213 = vadd.f32 %v1212, %v647
        %v1214 = vadd.f32 %v1213, %v652
        %v1215 = vadd.f32 %v1214, %v655
        %v1216 = vadd.f32 %v1215, %v660
        %v1217 = vadd.f32 %v1216, %v663
        %v1218 = vadd.f32 %v1217, %v668
        %v1219 = vadd.f32 %v1218, %v671
        %v1220 = vadd.f32 %v1219, %v676
        %v1221 = vadd.f32 %v1220, %v679
        %v1222 = vadd.f32 %v1221, %v684
        %v1223 = vadd.f32 %v1222, %v687
        %v1224 = vadd.f32 %v1223, %v692
        %v1225 = vadd.f32 %v1224, %v695
        %v1226 = vadd.f32 %v1225, %v700
        %v1227 = vadd.f32 %v1226, %v703
        %v1228 = vadd.f32 %v1227, %v708
        %v1229 = vadd.f32 %v1228, %v711
        %v1230 = vadd.f32 %v1229, %v716
        %v1231 = vadd.f32 %v1230, %v719
        %v1232 = vadd.f32 %v1231, %v724
        %v1233 = vadd.f32 %v1232, %v727
        %v1234 = vadd.f32 %v1233, %v732
        %v1235 = vadd.f32 %v1234, %v735
        %v1236 = vadd.f32 %v1235, %v740
        %v1237 = vadd.f32 %v1236, %v743
        %v1238 = vadd.f32 %v1237, %v748
        %v1239 = vadd.f32 %v1238, %v751
        %v1240 = vadd.f32 %v1239, %v756
        %v1241 = vadd.f32 %v1240, %v759
        %v1242 = vadd.f32 %v1241, %v764
        %v1243 = vadd.f32 %v1242, %v767
        %v1244 = vadd.f32 %v1243, %v772
        %v1245 = vadd.f32 %v1244, %v775
        %v1246 = vadd.f32 %v1245, %v780
        %v1247 = vadd.f32 %v1246, %v783
        %v1248 = vadd.f32 %v1247, %v788
        %v1249 = vadd.f32 %v1248, %v791
        %v1250 = vadd.f32 %v1249, %v796
        %v1251 = vadd.f32 %v1250, %v799
        %v1252 = vadd.f32 %v1251, %v804
        %v1253 = vadd.f32 %v1252, %v807
        %v1254 = vadd.f32 %v1253, %v812
        %v1255 = vadd.f32 %v1254, %v815
        %v1256 = vadd.f32 %v1255, %v820
        %v1257 = vadd.f32 %v1256, %v823
        %v1258 = vadd.f32 %v1257, %v828
        %v1259 = vadd.f32 %v1258, %v831
        %v1260 = vadd.f32 %v1259, %v836
        %v1261 = vadd.f32 %v1260, %v839
        %v1262 = vadd.f32 %v1261, %v844
        %v1263 = vadd.f32 %v1262, %v847
        %v1264 = vadd.f32 %v1263, %v852
        %v1265 = vadd.f32 %v1264, %v855
        %v1266 = vadd.f32 %v1265, %v860
        %v1267 = vadd.f32 %v1266, %v863
        %v1268 = vadd.f32 %v1267, %v868
        %v1269 = vadd.f32 %v1268, %v871
        %v1270 = vadd.f32 %v1269, %v876
        %v1271 = vadd.f32 %v1270, %v879
        %v1272 = vadd.f32 %v1271, %v884
        %v1273 = vadd.f32 %v1272, %v887
        %v1274 = vadd.f32 %v1210, %v1273
        %1275 = vst [vmem:[%s228] sm:$0xff] %v1274
        %v1276 = vld [vmem:[%s235] sm:$0xff]
        %v1277 = vmul.f32 %v636, %v636
        %v1278 = vmul.f32 %v639, %v639
        %v1279 = vmul.f32 %v644, %v644
        %v1280 = vmul.f32 %v647, %v647
        %v1281 = vmul.f32 %v652, %v652
        %v1282 = vmul.f32 %v655, %v655
        %v1283 = vmul.f32 %v660, %v660
        %v1284 = vmul.f32 %v663, %v663
        %v1285 = vmul.f32 %v668, %v668
        %v1286 = vmul.f32 %v671, %v671
        %v1287 = vmul.f32 %v676, %v676
        %v1288 = vmul.f32 %v679, %v679
        %v1289 = vmul.f32 %v684, %v684
        %v1290 = vmul.f32 %v687, %v687
        %v1291 = vmul.f32 %v692, %v692
        %v1292 = vmul.f32 %v695, %v695
        %v1293 = vmul.f32 %v700, %v700
        %v1294 = vmul.f32 %v703, %v703
        %v1295 = vmul.f32 %v708, %v708
        %v1296 = vmul.f32 %v711, %v711
        %v1297 = vmul.f32 %v716, %v716
        %v1298 = vmul.f32 %v719, %v719
        %v1299 = vmul.f32 %v724, %v724
        %v1300 = vmul.f32 %v727, %v727
        %v1301 = vmul.f32 %v732, %v732
        %v1302 = vmul.f32 %v735, %v735
        %v1303 = vmul.f32 %v740, %v740
        %v1304 = vmul.f32 %v743, %v743
        %v1305 = vmul.f32 %v748, %v748
        %v1306 = vmul.f32 %v751, %v751
        %v1307 = vmul.f32 %v756, %v756
        %v1308 = vmul.f32 %v759, %v759
        %v1309 = vmul.f32 %v764, %v764
        %v1310 = vmul.f32 %v767, %v767
        %v1311 = vmul.f32 %v772, %v772
        %v1312 = vmul.f32 %v775, %v775
        %v1313 = vmul.f32 %v780, %v780
        %v1314 = vmul.f32 %v783, %v783
        %v1315 = vmul.f32 %v788, %v788
        %v1316 = vmul.f32 %v791, %v791
        %v1317 = vmul.f32 %v796, %v796
        %v1318 = vmul.f32 %v799, %v799
        %v1319 = vmul.f32 %v804, %v804
        %v1320 = vmul.f32 %v807, %v807
        %v1321 = vmul.f32 %v812, %v812
        %v1322 = vmul.f32 %v815, %v815
        %v1323 = vmul.f32 %v820, %v820
        %v1324 = vmul.f32 %v823, %v823
        %v1325 = vmul.f32 %v828, %v828
        %v1326 = vmul.f32 %v831, %v831
        %v1327 = vmul.f32 %v836, %v836
        %v1328 = vmul.f32 %v839, %v839
        %v1329 = vmul.f32 %v844, %v844
        %v1330 = vmul.f32 %v847, %v847
        %v1331 = vmul.f32 %v852, %v852
        %v1332 = vmul.f32 %v855, %v855
        %v1333 = vmul.f32 %v860, %v860
        %v1334 = vmul.f32 %v863, %v863
        %v1335 = vmul.f32 %v868, %v868
        %v1336 = vmul.f32 %v871, %v871
        %v1337 = vmul.f32 %v876, %v876
        %v1338 = vmul.f32 %v879, %v879
        %v1339 = vmul.f32 %v884, %v884
        %v1340 = vmul.f32 %v887, %v887
        %v1341 = vadd.f32 %v1277, %v1278
        %v1342 = vadd.f32 %v1341, %v1279
        %v1343 = vadd.f32 %v1342, %v1280
        %v1344 = vadd.f32 %v1343, %v1281
        %v1345 = vadd.f32 %v1344, %v1282
        %v1346 = vadd.f32 %v1345, %v1283
        %v1347 = vadd.f32 %v1346, %v1284
        %v1348 = vadd.f32 %v1347, %v1285
        %v1349 = vadd.f32 %v1348, %v1286
        %v1350 = vadd.f32 %v1349, %v1287
        %v1351 = vadd.f32 %v1350, %v1288
        %v1352 = vadd.f32 %v1351, %v1289
        %v1353 = vadd.f32 %v1352, %v1290
        %v1354 = vadd.f32 %v1353, %v1291
        %v1355 = vadd.f32 %v1354, %v1292
        %v1356 = vadd.f32 %v1355, %v1293
        %v1357 = vadd.f32 %v1356, %v1294
        %v1358 = vadd.f32 %v1357, %v1295
        %v1359 = vadd.f32 %v1358, %v1296
        %v1360 = vadd.f32 %v1359, %v1297
        %v1361 = vadd.f32 %v1360, %v1298
        %v1362 = vadd.f32 %v1361, %v1299
        %v1363 = vadd.f32 %v1362, %v1300
        %v1364 = vadd.f32 %v1363, %v1301
        %v1365 = vadd.f32 %v1364, %v1302
        %v1366 = vadd.f32 %v1365, %v1303
        %v1367 = vadd.f32 %v1366, %v1304
        %v1368 = vadd.f32 %v1367, %v1305
        %v1369 = vadd.f32 %v1368, %v1306
        %v1370 = vadd.f32 %v1369, %v1307
        %v1371 = vadd.f32 %v1370, %v1308
        %v1372 = vadd.f32 %v1371, %v1309
        %v1373 = vadd.f32 %v1372, %v1310
        %v1374 = vadd.f32 %v1373, %v1311
        %v1375 = vadd.f32 %v1374, %v1312
        %v1376 = vadd.f32 %v1375, %v1313
        %v1377 = vadd.f32 %v1376, %v1314
        %v1378 = vadd.f32 %v1377, %v1315
        %v1379 = vadd.f32 %v1378, %v1316
        %v1380 = vadd.f32 %v1379, %v1317
        %v1381 = vadd.f32 %v1380, %v1318
        %v1382 = vadd.f32 %v1381, %v1319
        %v1383 = vadd.f32 %v1382, %v1320
        %v1384 = vadd.f32 %v1383, %v1321
        %v1385 = vadd.f32 %v1384, %v1322
        %v1386 = vadd.f32 %v1385, %v1323
        %v1387 = vadd.f32 %v1386, %v1324
        %v1388 = vadd.f32 %v1387, %v1325
        %v1389 = vadd.f32 %v1388, %v1326
        %v1390 = vadd.f32 %v1389, %v1327
        %v1391 = vadd.f32 %v1390, %v1328
        %v1392 = vadd.f32 %v1391, %v1329
        %v1393 = vadd.f32 %v1392, %v1330
        %v1394 = vadd.f32 %v1393, %v1331
        %v1395 = vadd.f32 %v1394, %v1332
        %v1396 = vadd.f32 %v1395, %v1333
        %v1397 = vadd.f32 %v1396, %v1334
        %v1398 = vadd.f32 %v1397, %v1335
        %v1399 = vadd.f32 %v1398, %v1336
        %v1400 = vadd.f32 %v1399, %v1337
        %v1401 = vadd.f32 %v1400, %v1338
        %v1402 = vadd.f32 %v1401, %v1339
        %v1403 = vadd.f32 %v1402, %v1340
        %v1404 = vadd.f32 %v1276, %v1403
        %1405 = vst [vmem:[%s235] sm:$0xff] %v1404
        %s1406 = sand.u32 %s97, 1
        %s1407 = scalar_lea.sflag [#allocation3], %s1406
        %s1408 = sand.u32 %s97, 1
        %s1409 = smul.addr %s1408, 256
        %s1410 = scalar_lea.vmem [#allocation2], %s1409
        %s1411 = sand.u32 %s22, 1
        %s1412 = scalar_lea.sflag [#allocation5], %s1411
        %s1413 = sand.u32 %s123, 1
        %s1414 = smul.addr %s1413, 8
        %s1415 = scalar_lea.vmem [#allocation4], %s1414
        %s1416 = sand.u32 %s22, 1
        %s1417 = scalar_lea.sflag [#allocation5], %s1416
        %s1418 = sand.u32 %s149, 1
        %s1419 = smul.addr %s1418, 8
        %s1420 = scalar_lea.vmem [#allocation6], %s1419
        // Predicated region
        $region33: #{tpu_custom_call.1} parent=27 // pred_check
          %p1421 = pneg %p107
        $region34: #{tpu_custom_call.1} parent=27 // pred_check_branch
          %1423 = sbr.rel (%p1421) target = $region36
        $region35: #{tpu_custom_call.1} parent=27 // pred_region
          %s1424 = smul.u32 %s26, 2
          %s1425 = sadd.s32 %s1424, %s27
          %s1426 = smul.u32 64, %s1425
          %s1428 = ssub.s32 4096, 4096
          %1429 = vsyncadd %s1407, %s1428
          %s1430 = smul.addr %s1426, 64
          %s1431 = scalar_lea.hbm %s2, %s1430
          %s1432 = sshll.u32 %s1410, 4
          %s1433 = int_to_ptr.vmem [resolvable:$true] %s1432
          %1438 = dma.vmem_to_hbm [thread:$0]  %s1433, 4096, %s1431, %s1407, 64, 64, 4
        $region36: #{tpu_custom_call.1} parent=27 // pred_fallthru
          _
        // Predicated region
        $region37: #{tpu_custom_call.1} parent=27 // pred_check
          %p1439 = pneg %p133
        $region38: #{tpu_custom_call.1} parent=27 // pred_check_branch
          %1441 = sbr.rel (%p1439) target = $region40
        $region39: #{tpu_custom_call.1} parent=27 // pred_region
          %s1443 = ssub.s32 128, 128
          %1444 = vsyncadd %s1412, %s1443
          %s1445 = smul.addr %s26, 128
          %s1446 = scalar_lea.hbm %s3, %s1445
          %s1448 = sshll.u32 %s1415, 4
          %s1449 = int_to_ptr.vmem [resolvable:$true] %s1448
          %1451 = dma.vmem_to_hbm [thread:$0]  %s1449, 128, %s1446, %s1412
        $region40: #{tpu_custom_call.1} parent=27 // pred_fallthru
          _
        // Predicated region
        $region41: #{tpu_custom_call.1} parent=27 // pred_check
          %p1452 = pneg %p159
        $region42: #{tpu_custom_call.1} parent=27 // pred_check_branch
          %1454 = sbr.rel (%p1452) target = $region44
        $region43: #{tpu_custom_call.1} parent=27 // pred_region
          %s1456 = ssub.s32 128, 128
          %1457 = vsyncadd %s1417, %s1456
          %s1458 = smul.addr %s26, 128
          %s1459 = scalar_lea.hbm %s4, %s1458
          %s1461 = sshll.u32 %s1420, 4
          %s1462 = int_to_ptr.vmem [resolvable:$true] %s1461
          %1464 = dma.vmem_to_hbm [thread:$0]  %s1462, 128, %s1459, %s1417
        $region44: #{tpu_custom_call.1} parent=27 // pred_fallthru
          _
      $region28: #{tpu_custom_call.1} parent=5 // pred_fallthru
        _
      %p1465 = scmp.le.s32.totalorder 2, %s17
      // Predicated region
      $region45: #{tpu_custom_call.1} parent=5 // pred_check
        %p1466 = pneg %p1465
      $region46: #{tpu_custom_call.1} parent=5 // pred_check_branch
        %1468 = sbr.rel (%p1466) target = $region48
      $region47: #{tpu_custom_call.1} parent=5 // pred_region
        %s1469 = ssub.s32 %s17, 2
        // Predicated region
        $region49: #{tpu_custom_call.1} parent=47 // pred_check
          %p1470 = pneg %p113
        $region50: #{tpu_custom_call.1} parent=47 // pred_check_branch
          %1472 = sbr.rel (%p1470) target = $region52
        $region51: #{tpu_custom_call.1} parent=47 // pred_region
          %s1473 = sand.u32 %s98, 1
          %s1474 = scalar_lea.sflag [#allocation3], %s1473
          %s1475 = sand.u32 %s98, 1
          %s1476 = smul.addr %s1475, 256
          %s1477 = scalar_lea.vmem [#allocation2], %s1476
          %1478 = dma.done %s1474, 4096
        $region52: #{tpu_custom_call.1} parent=47 // pred_fallthru
          _
        // Predicated region
        $region53: #{tpu_custom_call.1} parent=47 // pred_check
          %p1479 = pneg %p139
        $region54: #{tpu_custom_call.1} parent=47 // pred_check_branch
          %1481 = sbr.rel (%p1479) target = $region56
        $region55: #{tpu_custom_call.1} parent=47 // pred_region
          %s1482 = sand.u32 %s23, 1
          %s1483 = scalar_lea.sflag [#allocation5], %s1482
          %s1484 = sand.u32 %s124, 1
          %s1485 = smul.addr %s1484, 8
          %s1486 = scalar_lea.vmem [#allocation4], %s1485
          %1487 = dma.done %s1483, 128
        $region56: #{tpu_custom_call.1} parent=47 // pred_fallthru
          _
        // Predicated region
        $region57: #{tpu_custom_call.1} parent=47 // pred_check
          %p1488 = pneg %p165
        $region58: #{tpu_custom_call.1} parent=47 // pred_check_branch
          %1490 = sbr.rel (%p1488) target = $region60
        $region59: #{tpu_custom_call.1} parent=47 // pred_region
          %s1491 = sand.u32 %s23, 1
          %s1492 = scalar_lea.sflag [#allocation5], %s1491
          %s1493 = sand.u32 %s150, 1
          %s1494 = smul.addr %s1493, 8
          %s1495 = scalar_lea.vmem [#allocation6], %s1494
          %1496 = dma.done %s1492, 128
        $region60: #{tpu_custom_call.1} parent=47 // pred_fallthru
          _
      $region48: #{tpu_custom_call.1} parent=5 // pred_fallthru
        _
    $region6: #{tpu_custom_call.1} parent=1 // loop_footer
      %s21 = sadd.s32 1, %s17
    $region7: #{tpu_custom_call.1} parent=1 // loop_footer_branch
      %16 = sbr.rel target = $region3
    $region8: #{tpu_custom_call.1} parent=1 // loop_exit
      _
    %1497 = vsyncpa [#allocation3], 1
    %s1498 = scalar_lea.sflag [#allocation3], 1
    %1499 = vsyncpa %s1498, 1
    %1500 = vsyncpa [#allocation5], 1
    %s1501 = scalar_lea.sflag [#allocation5], 1
    %1502 = vsyncpa %s1501, 1

</llo_original>
